<compile_context>
chip_gen: v6e
topology: v6e:2x2x1
jax: 0.10.0
libtpu: 0.0.40
codegen_flags: <defaults>
</compile_context>

<pallas_src>
import numpy as np
import jax
import jax.numpy as jnp
from jax import lax
from jax.experimental import pallas as pl
from jax.experimental.pallas import tpu as pltpu

EDG_NULL = 0
_NEG_INF = float("-inf")
_GROUP = 8            # components merged per output-lane group (static 8-lane stores)


def _round_up(v, m):
    return ((v + m - 1) // m) * m


def _pick_tiles(n_pts, n_nodes, n_cmp):
    """Choose (tile_pts, tile_cmp, cmp_pad, bias_resident, vmem_limit_bytes)."""
    try:
        vmem_cap = int(pltpu.get_tpu_info().vmem_capacity_bytes)   # 128 MiB v5e/v6e, 64 MiB v7x
    except Exception:
        vmem_cap = 64 << 20                                        # conservative (v7x-sized)
    small_vmem = vmem_cap < (100 << 20)                            # v7x-class part
    vmem_limit = (32 << 20) if small_vmem else (64 << 20)
    budget = (vmem_limit * 4) // 5                                 # ~20% headroom for Mosaic scratch

    if n_cmp <= 128:
        tile_cmp = _round_up(max(n_cmp, _GROUP), _GROUP)           # single cmp tile
        cmp_pad = tile_cmp
    else:
        tile_cmp = 128                                             # lane-dense output tiles
        cmp_pad = _round_up(n_cmp, 128)

    bias_bytes = cmp_pad * n_nodes * 4
    bias_resident = 2 * bias_bytes <= budget // 2                  # whole bias stays in VMEM

    # pts tile: as big as the budget allows, capped per generation; on the 2-TensorCore part
    # keep >= 2 pts grid steps so megacore has something to shard.
    cap = 512 if small_vmem else 1024
    if small_vmem and n_pts > 8:
        cap = min(cap, _round_up(-(-n_pts // 2), 8))
    tile_pts = max(8, min(cap, _round_up(n_pts, 8)))

    def step_bytes(tp):
        x_blk = 2 * tp * n_nodes * 4                               # double-buffered x tile
        b_blk = 2 * (cmp_pad if bias_resident else tile_cmp) * n_nodes * 4
        o_blk = 2 * 2 * tp * tile_cmp * 4                          # two double-buffered outputs
        tmp = 5 * tp * n_nodes * 4                                 # abs_x / vals / hits / iota
        grp = 4 * tp * _GROUP * 4                                  # group accumulators + scratch
        return x_blk + b_blk + o_blk + tmp + grp

    while tile_pts > 8 and step_bytes(tile_pts) > budget:
        tile_pts = max(8, _round_up(tile_pts // 2, 8))
    if bias_resident and step_bytes(tile_pts) > budget:
        bias_resident = False                                      # give the VMEM back to the pipeline
    # TODO(synk): extremely large n_nodes (a full node row no longer fits VMEM) would need a
    # node-tiled variant with partial max/argmax combining; not implemented here.
    return tile_pts, tile_cmp, cmp_pad, bias_resident, vmem_limit


def _make_kernel(*, n_cmp, tile_cmp, bias_resident, single_cmp_step):
    group = _GROUP

    def kernel(x_ref, bias_ref, code_ref, idx_ref, code_g_ref, idx_g_ref):
        # x_ref:    (tile_pts, n_nodes) f32 — energies (resident across the cmp grid axis)
        # bias_ref: (cmp_pad | tile_cmp, n_nodes) f32 — 0 for live edges, -inf for null edges
        # code_ref, idx_ref: (tile_pts, tile_cmp) f32 outputs
        # code_g_ref/idx_g_ref: (tile_pts, group) f32 scratch (used on the dynamic path only)
        tile_pts, n_nodes = x_ref.shape
        abs_x = jnp.abs(x_ref[...])                                            # one pass per grid step
        node_iota = lax.broadcasted_iota(jnp.int32, (tile_pts, n_nodes), 1).astype(jnp.float32)
        lane_g = lax.broadcasted_iota(jnp.int32, (tile_pts, group), 1)
        no_hit = jnp.float32(n_nodes)
        zeros_g = jnp.zeros((tile_pts, group), jnp.float32)

        cmp_base = 0 if single_cmp_step else pl.program_id(1) * tile_cmp       # first comp of this tile

        def comp_result(i):
            """Masked max + first-occurrence argmax of |x| for component `i` of this cmp tile."""
            row = (cmp_base + i) if bias_resident else i
            b = bias_ref[pl.ds(row, 1), :]                                     # (1, n_nodes): 0 / -inf
            vals = abs_x + b                                                   # null edges -> -inf
            m = jnp.max(vals, axis=-1, keepdims=True)                          # (tile_pts, 1)
            hits = jnp.where(vals == m, node_iota, no_hit)
            arg = jnp.min(hits, axis=-1, keepdims=True)                        # first max, exact in f32
            return jnp.maximum(m, 0.0), arg                                    # empty comp: -inf -> 0

        if single_cmp_step:
            # n_cmp <= 128: static live count, fully unrolled (<= `group` comps per group).
            n_live = min(n_cmp, tile_cmp)
            for g0 in range(0, tile_cmp, group):
                code_g, idx_g = zeros_g, zeros_g
                for k in range(min(group, max(0, n_live - g0))):
                    m, a = comp_result(g0 + k)
                    col = lane_g == k
                    code_g = jnp.where(col, m, code_g)
                    idx_g = jnp.where(col, a, idx_g)
                code_ref[:, g0:g0 + group] = code_g                            # static lane slice store
                idx_ref[:, g0:g0 + group] = idx_g
        else:
            # multiple cmp tiles: live count depends on the grid position (skip padded comps).
            n_live = jnp.minimum(jnp.int32(n_cmp) - cmp_base, tile_cmp)
            for g0 in range(0, tile_cmp, group):
                live_g = jnp.clip(n_live - g0, 0, group)
                code_g_ref[...] = zeros_g
                idx_g_ref[...] = zeros_g

                def body(k, carry, g0=g0):
                    m, a = comp_result(g0 + k)
                    col = lane_g == k
                    code_g_ref[...] = jnp.where(col, m, code_g_ref[...])
                    idx_g_ref[...] = jnp.where(col, a, idx_g_ref[...])
                    return carry

                lax.fori_loop(0, live_g, body, 0)
                code_ref[:, g0:g0 + group] = code_g_ref[...]
                idx_ref[:, g0:g0 + group] = idx_g_ref[...]

    return kernel


def hnet_max_abs(x, learned_edge_states, *, tile_pts=None):
    """Pallas implementation of HNetMaxAbs.forward.

    x:                    (n_pts, n_nodes) float — energies per datapoint.
    learned_edge_states:  (n_cmp, n_nodes); entries == EDG_NULL (0) are null edges.
                          (The torch module assumes a square matrix: n_cmp == n_nodes.)
    Returns (newCompCode, premerge_idx), both (n_pts, n_cmp) float32.
    """
    x = jnp.asarray(x, jnp.float32)
    les = jnp.asarray(learned_edge_states)
    n_pts, n_nodes = x.shape
    n_cmp, les_nodes = les.shape
    if les_nodes != n_nodes:
        raise ValueError(f"learned_edge_states has {les_nodes} node columns, x has {n_nodes}")
    if n_nodes >= (1 << 24):
        raise ValueError("premerge_idx is float32: exact node indices need n_nodes < 2**24")

    # Additive mask: 0 keeps |x|; -inf can never win the max (|x| is finite, >= 0).
    bias = jnp.where(les != EDG_NULL, 0.0, _NEG_INF).astype(jnp.float32)

    auto_tp, tile_cmp, cmp_pad, bias_resident, vmem_limit = _pick_tiles(n_pts, n_nodes, n_cmp)
    if tile_pts is None:
        tile_pts = auto_tp
    elif tile_pts < 8 or tile_pts % 8:
        raise ValueError("tile_pts override must be a positive multiple of 8")

    pts_pad = _round_up(n_pts, tile_pts)
    if pts_pad != n_pts:
        x = jnp.pad(x, ((0, pts_pad - n_pts), (0, 0)))
    if cmp_pad != n_cmp:
        bias = jnp.pad(bias, ((0, cmp_pad - n_cmp), (0, 0)), constant_values=_NEG_INF)

    cmp_steps = cmp_pad // tile_cmp
    single_cmp_step = cmp_steps == 1
    grid = (pts_pad // tile_pts, cmp_steps)            # cmp innermost: x tile stays resident

    if bias_resident:
        bias_spec = pl.BlockSpec((cmp_pad, n_nodes), lambda p, c: (0, 0))      # DMA'd once, resident
    else:
        bias_spec = pl.BlockSpec((tile_cmp, n_nodes), lambda p, c: (c, 0))

    kernel = _make_kernel(n_cmp=n_cmp, tile_cmp=tile_cmp,
                          bias_resident=bias_resident, single_cmp_step=single_cmp_step)

    out_shapes = (
        jax.ShapeDtypeStruct((pts_pad, cmp_pad), jnp.float32),
        jax.ShapeDtypeStruct((pts_pad, cmp_pad), jnp.float32),
    )
    code, idx = pl.pallas_call(
        kernel,
        out_shape=out_shapes,
        grid_spec=pltpu.PrefetchScalarGridSpec(
            num_scalar_prefetch=0,
            grid=grid,
            in_specs=[
                pl.BlockSpec((tile_pts, n_nodes), lambda p, c: (p, 0)),        # constant in c -> no re-DMA
                bias_spec,
            ],
            out_specs=[
                pl.BlockSpec((tile_pts, tile_cmp), lambda p, c: (p, c)),
                pl.BlockSpec((tile_pts, tile_cmp), lambda p, c: (p, c)),
            ],
            scratch_shapes=[
                pltpu.VMEM((tile_pts, _GROUP), jnp.float32),                   # per-group code accumulator
                pltpu.VMEM((tile_pts, _GROUP), jnp.float32),                   # per-group index accumulator
            ],
        ),
        compiler_params=pltpu.CompilerParams(
            # pts axis parallel (megacore shards it on 2-TC parts); cmp axis arbitrary so the
            # resident x / bias tiles are not duplicated across cores.
            dimension_semantics=("parallel", "arbitrary"),
            vmem_limit_bytes=vmem_limit,
        ),
    )(x, bias)

    if pts_pad != n_pts or cmp_pad != n_cmp:
        code = code[:n_pts, :n_cmp]
        idx = idx[:n_pts, :n_cmp]
    return code, idx


def _reference(x, learned_edge_states):
    """Pure NumPy transcription of the intended torch forward (for verification)."""
    xn = np.asarray(x, dtype=np.float32)
    mask = np.asarray(learned_edge_states) != EDG_NULL
    n_pts, _ = xn.shape
    n_cmp = mask.shape[0]
    code = np.zeros((n_pts, n_cmp), np.float32)
    pre = np.zeros((n_pts, n_cmp), np.float32)
    for i in range(n_cmp):
        idx = np.nonzero(mask[i, :])[0]
        if idx.size > 0:
            sub = np.abs(xn[:, idx])
            am = np.argmax(sub, axis=1)            # first-max, same tie-break as torch.max
            code[:, i] = sub[np.arange(n_pts), am]
            pre[:, i] = idx[am]                    # map back to original node indices
    return code, pre


def _check(x, les):
    code, pre = hnet_max_abs(x, les)
    code, pre = jax.block_until_ready((code, pre))
    ref_code, ref_pre = _reference(np.asarray(x), np.asarray(les))
    np.testing.assert_allclose(np.asarray(code), ref_code, rtol=1e-6, atol=1e-6)
    np.testing.assert_array_equal(np.asarray(pre), ref_pre)


if __name__ == "__main__":
    key = jax.random.PRNGKey(0)
    k_x, k_mask, k_x2, k_mask2 = jax.random.split(key, 4)

    # 1) square edge-state matrix (n_cmp == n_nodes), single cmp tile -> static unrolled path.
    #    One all-null row exercises the empty-component path (outputs must stay 0 there).
    n_pts, n_nodes = 64, 16
    x = jax.random.normal(k_x, (n_pts, n_nodes), dtype=jnp.float32)
    les = jax.random.randint(k_mask, (n_nodes, n_nodes), 0, 3).astype(jnp.int32)
    les = les.at[3, :].set(0)
    _check(x, les)

    # 2) n_cmp > 128: multiple cmp tiles -> dynamic live-component path (last tile mostly padded).
    n_pts2, n_nodes2, n_cmp2 = 32, 24, 132
    x2 = jax.random.normal(k_x2, (n_pts2, n_nodes2), dtype=jnp.float32)
    les2 = jax.random.randint(k_mask2, (n_cmp2, n_nodes2), 0, 2).astype(jnp.int32)
    les2 = les2.at[7, :].set(0)
    _check(x2, les2)

    print("KERNEL_OK")
</pallas_src>

<mosaic_0001>
module attributes {stable_mosaic.version = 11 : i64} {
  func.func @kernel(%arg0: i32, %arg1: i32, %arg2: memref<32x16xf32, #tpu.memory_space<vmem>>, %arg3: memref<16x16xf32, #tpu.memory_space<vmem>>, %arg4: memref<32x16xf32, #tpu.memory_space<vmem>>, %arg5: memref<32x16xf32, #tpu.memory_space<vmem>>, %arg6: memref<32x8xf32, #tpu.memory_space<vmem>>, %arg7: memref<32x8xf32, #tpu.memory_space<vmem>>) attributes {dimension_semantics = [#tpu.dimension_semantics<parallel>, #tpu.dimension_semantics<arbitrary>], iteration_bounds = array<i64: 2, 1>, scalar_prefetch = 0 : i64, scratch_operands = 2 : i64, tpu.core_type = #tpu.core_type<tc>, window_params = [{transform_indices = @transform_0, window_bounds = array<i64: 32, 16>}, {pipeline_mode = #tpu.pipeline_mode<synchronous>, transform_indices = @transform_1, window_bounds = array<i64: 16, 16>}, {transform_indices = @transform_2, window_bounds = array<i64: 32, 16>}, {transform_indices = @transform_3, window_bounds = array<i64: 32, 16>}]} {
    %c0 = arith.constant 0 : index
    %c0_0 = arith.constant 0 : index
    %0 = vector.load %arg2[%c0, %c0_0] : memref<32x16xf32, #tpu.memory_space<vmem>>, vector<32x16xf32>
    %1 = math.absf %0 : vector<32x16xf32>
    %2 = tpu.iota {dimensions = array<i32: 1>} : vector<32x16xi32>
    %3 = arith.sitofp %2 : vector<32x16xi32> to vector<32x16xf32>
    %4 = tpu.iota {dimensions = array<i32: 1>} : vector<32x8xi32>
    %cst = arith.constant 0.000000e+00 : f32
    %5 = vector.broadcast %cst : f32 to vector<32x8xf32>
    %c0_1 = arith.constant 0 : index
    %c0_2 = arith.constant 0 : index
    %6 = vector.load %arg3[%c0_1, %c0_2] : memref<16x16xf32, #tpu.memory_space<vmem>>, vector<1x16xf32>
    %7 = vector.broadcast %6 : vector<1x16xf32> to vector<32x16xf32>
    %8 = arith.addf %1, %7 : vector<32x16xf32>
    %cst_3 = arith.constant dense<0xFF800000> : vector<32xf32>
    %9 = vector.multi_reduction <maximumf>, %8, %cst_3 [1] : vector<32x16xf32> to vector<32xf32>
    %10 = vector.shape_cast %9 : vector<32xf32> to vector<32x1xf32>
    %11 = vector.broadcast %10 : vector<32x1xf32> to vector<32x16xf32>
    %12 = arith.cmpf oeq, %8, %11 : vector<32x16xf32>
    %cst_4 = arith.constant 1.600000e+01 : f32
    %13 = vector.broadcast %cst_4 : f32 to vector<32x16xf32>
    %14 = arith.select %12, %3, %13 : vector<32x16xi1>, vector<32x16xf32>
    %cst_5 = arith.constant dense<0x7F800000> : vector<32xf32>
    %15 = vector.multi_reduction <minimumf>, %14, %cst_5 [1] : vector<32x16xf32> to vector<32xf32>
    %16 = vector.shape_cast %15 : vector<32xf32> to vector<32x1xf32>
    %cst_6 = arith.constant 0.000000e+00 : f32
    %17 = vector.broadcast %cst_6 : f32 to vector<32x1xf32>
    %18 = arith.maximumf %10, %17 : vector<32x1xf32>
    %c0_i32 = arith.constant 0 : i32
    %19 = vector.broadcast %c0_i32 : i32 to vector<32x8xi32>
    %20 = arith.cmpi eq, %4, %19 : vector<32x8xi32>
    %21 = vector.shape_cast %18 : vector<32x1xf32> to vector<32x1xf32>
    %22 = vector.broadcast %21 : vector<32x1xf32> to vector<32x8xf32>
    %23 = arith.select %20, %22, %5 : vector<32x8xi1>, vector<32x8xf32>
    %24 = vector.shape_cast %16 : vector<32x1xf32> to vector<32x1xf32>
    %25 = vector.broadcast %24 : vector<32x1xf32> to vector<32x8xf32>
    %26 = arith.select %20, %25, %5 : vector<32x8xi1>, vector<32x8xf32>
    %c1 = arith.constant 1 : index
    %c0_7 = arith.constant 0 : index
    %27 = vector.load %arg3[%c1, %c0_7] : memref<16x16xf32, #tpu.memory_space<vmem>>, vector<1x16xf32>
    %28 = vector.broadcast %27 : vector<1x16xf32> to vector<32x16xf32>
    %29 = arith.addf %1, %28 : vector<32x16xf32>
    %cst_8 = arith.constant dense<0xFF800000> : vector<32xf32>
    %30 = vector.multi_reduction <maximumf>, %29, %cst_8 [1] : vector<32x16xf32> to vector<32xf32>
    %31 = vector.shape_cast %30 : vector<32xf32> to vector<32x1xf32>
    %32 = vector.broadcast %31 : vector<32x1xf32> to vector<32x16xf32>
    %33 = arith.cmpf oeq, %29, %32 : vector<32x16xf32>
    %cst_9 = arith.constant 1.600000e+01 : f32
    %34 = vector.broadcast %cst_9 : f32 to vector<32x16xf32>
    %35 = arith.select %33, %3, %34 : vector<32x16xi1>, vector<32x16xf32>
    %cst_10 = arith.constant dense<0x7F800000> : vector<32xf32>
    %36 = vector.multi_reduction <minimumf>, %35, %cst_10 [1] : vector<32x16xf32> to vector<32xf32>
    %37 = vector.shape_cast %36 : vector<32xf32> to vector<32x1xf32>
    %cst_11 = arith.constant 0.000000e+00 : f32
    %38 = vector.broadcast %cst_11 : f32 to vector<32x1xf32>
    %39 = arith.maximumf %31, %38 : vector<32x1xf32>
    %c1_i32 = arith.constant 1 : i32
    %40 = vector.broadcast %c1_i32 : i32 to vector<32x8xi32>
    %41 = arith.cmpi eq, %4, %40 : vector<32x8xi32>
    %42 = vector.shape_cast %39 : vector<32x1xf32> to vector<32x1xf32>
    %43 = vector.broadcast %42 : vector<32x1xf32> to vector<32x8xf32>
    %44 = arith.select %41, %43, %23 : vector<32x8xi1>, vector<32x8xf32>
    %45 = vector.shape_cast %37 : vector<32x1xf32> to vector<32x1xf32>
    %46 = vector.broadcast %45 : vector<32x1xf32> to vector<32x8xf32>
    %47 = arith.select %41, %46, %26 : vector<32x8xi1>, vector<32x8xf32>
    %c2 = arith.constant 2 : index
    %c0_12 = arith.constant 0 : index
    %48 = vector.load %arg3[%c2, %c0_12] : memref<16x16xf32, #tpu.memory_space<vmem>>, vector<1x16xf32>
    %49 = vector.broadcast %48 : vector<1x16xf32> to vector<32x16xf32>
    %50 = arith.addf %1, %49 : vector<32x16xf32>
    %cst_13 = arith.constant dense<0xFF800000> : vector<32xf32>
    %51 = vector.multi_reduction <maximumf>, %50, %cst_13 [1] : vector<32x16xf32> to vector<32xf32>
    %52 = vector.shape_cast %51 : vector<32xf32> to vector<32x1xf32>
    %53 = vector.broadcast %52 : vector<32x1xf32> to vector<32x16xf32>
    %54 = arith.cmpf oeq, %50, %53 : vector<32x16xf32>
    %cst_14 = arith.constant 1.600000e+01 : f32
    %55 = vector.broadcast %cst_14 : f32 to vector<32x16xf32>
    %56 = arith.select %54, %3, %55 : vector<32x16xi1>, vector<32x16xf32>
    %cst_15 = arith.constant dense<0x7F800000> : vector<32xf32>
    %57 = vector.multi_reduction <minimumf>, %56, %cst_15 [1] : vector<32x16xf32> to vector<32xf32>
    %58 = vector.shape_cast %57 : vector<32xf32> to vector<32x1xf32>
    %cst_16 = arith.constant 0.000000e+00 : f32
    %59 = vector.broadcast %cst_16 : f32 to vector<32x1xf32>
    %60 = arith.maximumf %52, %59 : vector<32x1xf32>
    %c2_i32 = arith.constant 2 : i32
    %61 = vector.broadcast %c2_i32 : i32 to vector<32x8xi32>
    %62 = arith.cmpi eq, %4, %61 : vector<32x8xi32>
    %63 = vector.shape_cast %60 : vector<32x1xf32> to vector<32x1xf32>
    %64 = vector.broadcast %63 : vector<32x1xf32> to vector<32x8xf32>
    %65 = arith.select %62, %64, %44 : vector<32x8xi1>, vector<32x8xf32>
    %66 = vector.shape_cast %58 : vector<32x1xf32> to vector<32x1xf32>
    %67 = vector.broadcast %66 : vector<32x1xf32> to vector<32x8xf32>
    %68 = arith.select %62, %67, %47 : vector<32x8xi1>, vector<32x8xf32>
    %c3 = arith.constant 3 : index
    %c0_17 = arith.constant 0 : index
    %69 = vector.load %arg3[%c3, %c0_17] : memref<16x16xf32, #tpu.memory_space<vmem>>, vector<1x16xf32>
    %70 = vector.broadcast %69 : vector<1x16xf32> to vector<32x16xf32>
    %71 = arith.addf %1, %70 : vector<32x16xf32>
    %cst_18 = arith.constant dense<0xFF800000> : vector<32xf32>
    %72 = vector.multi_reduction <maximumf>, %71, %cst_18 [1] : vector<32x16xf32> to vector<32xf32>
    %73 = vector.shape_cast %72 : vector<32xf32> to vector<32x1xf32>
    %74 = vector.broadcast %73 : vector<32x1xf32> to vector<32x16xf32>
    %75 = arith.cmpf oeq, %71, %74 : vector<32x16xf32>
    %cst_19 = arith.constant 1.600000e+01 : f32
    %76 = vector.broadcast %cst_19 : f32 to vector<32x16xf32>
    %77 = arith.select %75, %3, %76 : vector<32x16xi1>, vector<32x16xf32>
    %cst_20 = arith.constant dense<0x7F800000> : vector<32xf32>
    %78 = vector.multi_reduction <minimumf>, %77, %cst_20 [1] : vector<32x16xf32> to vector<32xf32>
    %79 = vector.shape_cast %78 : vector<32xf32> to vector<32x1xf32>
    %cst_21 = arith.constant 0.000000e+00 : f32
    %80 = vector.broadcast %cst_21 : f32 to vector<32x1xf32>
    %81 = arith.maximumf %73, %80 : vector<32x1xf32>
    %c3_i32 = arith.constant 3 : i32
    %82 = vector.broadcast %c3_i32 : i32 to vector<32x8xi32>
    %83 = arith.cmpi eq, %4, %82 : vector<32x8xi32>
    %84 = vector.shape_cast %81 : vector<32x1xf32> to vector<32x1xf32>
    %85 = vector.broadcast %84 : vector<32x1xf32> to vector<32x8xf32>
    %86 = arith.select %83, %85, %65 : vector<32x8xi1>, vector<32x8xf32>
    %87 = vector.shape_cast %79 : vector<32x1xf32> to vector<32x1xf32>
    %88 = vector.broadcast %87 : vector<32x1xf32> to vector<32x8xf32>
    %89 = arith.select %83, %88, %68 : vector<32x8xi1>, vector<32x8xf32>
    %c4 = arith.constant 4 : index
    %c0_22 = arith.constant 0 : index
    %90 = vector.load %arg3[%c4, %c0_22] : memref<16x16xf32, #tpu.memory_space<vmem>>, vector<1x16xf32>
    %91 = vector.broadcast %90 : vector<1x16xf32> to vector<32x16xf32>
    %92 = arith.addf %1, %91 : vector<32x16xf32>
    %cst_23 = arith.constant dense<0xFF800000> : vector<32xf32>
    %93 = vector.multi_reduction <maximumf>, %92, %cst_23 [1] : vector<32x16xf32> to vector<32xf32>
    %94 = vector.shape_cast %93 : vector<32xf32> to vector<32x1xf32>
    %95 = vector.broadcast %94 : vector<32x1xf32> to vector<32x16xf32>
    %96 = arith.cmpf oeq, %92, %95 : vector<32x16xf32>
    %cst_24 = arith.constant 1.600000e+01 : f32
    %97 = vector.broadcast %cst_24 : f32 to vector<32x16xf32>
    %98 = arith.select %96, %3, %97 : vector<32x16xi1>, vector<32x16xf32>
    %cst_25 = arith.constant dense<0x7F800000> : vector<32xf32>
    %99 = vector.multi_reduction <minimumf>, %98, %cst_25 [1] : vector<32x16xf32> to vector<32xf32>
    %100 = vector.shape_cast %99 : vector<32xf32> to vector<32x1xf32>
    %cst_26 = arith.constant 0.000000e+00 : f32
    %101 = vector.broadcast %cst_26 : f32 to vector<32x1xf32>
    %102 = arith.maximumf %94, %101 : vector<32x1xf32>
    %c4_i32 = arith.constant 4 : i32
    %103 = vector.broadcast %c4_i32 : i32 to vector<32x8xi32>
    %104 = arith.cmpi eq, %4, %103 : vector<32x8xi32>
    %105 = vector.shape_cast %102 : vector<32x1xf32> to vector<32x1xf32>
    %106 = vector.broadcast %105 : vector<32x1xf32> to vector<32x8xf32>
    %107 = arith.select %104, %106, %86 : vector<32x8xi1>, vector<32x8xf32>
    %108 = vector.shape_cast %100 : vector<32x1xf32> to vector<32x1xf32>
    %109 = vector.broadcast %108 : vector<32x1xf32> to vector<32x8xf32>
    %110 = arith.select %104, %109, %89 : vector<32x8xi1>, vector<32x8xf32>
    %c5 = arith.constant 5 : index
    %c0_27 = arith.constant 0 : index
    %111 = vector.load %arg3[%c5, %c0_27] : memref<16x16xf32, #tpu.memory_space<vmem>>, vector<1x16xf32>
    %112 = vector.broadcast %111 : vector<1x16xf32> to vector<32x16xf32>
    %113 = arith.addf %1, %112 : vector<32x16xf32>
    %cst_28 = arith.constant dense<0xFF800000> : vector<32xf32>
    %114 = vector.multi_reduction <maximumf>, %113, %cst_28 [1] : vector<32x16xf32> to vector<32xf32>
    %115 = vector.shape_cast %114 : vector<32xf32> to vector<32x1xf32>
    %116 = vector.broadcast %115 : vector<32x1xf32> to vector<32x16xf32>
    %117 = arith.cmpf oeq, %113, %116 : vector<32x16xf32>
    %cst_29 = arith.constant 1.600000e+01 : f32
    %118 = vector.broadcast %cst_29 : f32 to vector<32x16xf32>
    %119 = arith.select %117, %3, %118 : vector<32x16xi1>, vector<32x16xf32>
    %cst_30 = arith.constant dense<0x7F800000> : vector<32xf32>
    %120 = vector.multi_reduction <minimumf>, %119, %cst_30 [1] : vector<32x16xf32> to vector<32xf32>
    %121 = vector.shape_cast %120 : vector<32xf32> to vector<32x1xf32>
    %cst_31 = arith.constant 0.000000e+00 : f32
    %122 = vector.broadcast %cst_31 : f32 to vector<32x1xf32>
    %123 = arith.maximumf %115, %122 : vector<32x1xf32>
    %c5_i32 = arith.constant 5 : i32
    %124 = vector.broadcast %c5_i32 : i32 to vector<32x8xi32>
    %125 = arith.cmpi eq, %4, %124 : vector<32x8xi32>
    %126 = vector.shape_cast %123 : vector<32x1xf32> to vector<32x1xf32>
    %127 = vector.broadcast %126 : vector<32x1xf32> to vector<32x8xf32>
    %128 = arith.select %125, %127, %107 : vector<32x8xi1>, vector<32x8xf32>
    %129 = vector.shape_cast %121 : vector<32x1xf32> to vector<32x1xf32>
    %130 = vector.broadcast %129 : vector<32x1xf32> to vector<32x8xf32>
    %131 = arith.select %125, %130, %110 : vector<32x8xi1>, vector<32x8xf32>
    %c6 = arith.constant 6 : index
    %c0_32 = arith.constant 0 : index
    %132 = vector.load %arg3[%c6, %c0_32] : memref<16x16xf32, #tpu.memory_space<vmem>>, vector<1x16xf32>
    %133 = vector.broadcast %132 : vector<1x16xf32> to vector<32x16xf32>
    %134 = arith.addf %1, %133 : vector<32x16xf32>
    %cst_33 = arith.constant dense<0xFF800000> : vector<32xf32>
    %135 = vector.multi_reduction <maximumf>, %134, %cst_33 [1] : vector<32x16xf32> to vector<32xf32>
    %136 = vector.shape_cast %135 : vector<32xf32> to vector<32x1xf32>
    %137 = vector.broadcast %136 : vector<32x1xf32> to vector<32x16xf32>
    %138 = arith.cmpf oeq, %134, %137 : vector<32x16xf32>
    %cst_34 = arith.constant 1.600000e+01 : f32
    %139 = vector.broadcast %cst_34 : f32 to vector<32x16xf32>
    %140 = arith.select %138, %3, %139 : vector<32x16xi1>, vector<32x16xf32>
    %cst_35 = arith.constant dense<0x7F800000> : vector<32xf32>
    %141 = vector.multi_reduction <minimumf>, %140, %cst_35 [1] : vector<32x16xf32> to vector<32xf32>
    %142 = vector.shape_cast %141 : vector<32xf32> to vector<32x1xf32>
    %cst_36 = arith.constant 0.000000e+00 : f32
    %143 = vector.broadcast %cst_36 : f32 to vector<32x1xf32>
    %144 = arith.maximumf %136, %143 : vector<32x1xf32>
    %c6_i32 = arith.constant 6 : i32
    %145 = vector.broadcast %c6_i32 : i32 to vector<32x8xi32>
    %146 = arith.cmpi eq, %4, %145 : vector<32x8xi32>
    %147 = vector.shape_cast %144 : vector<32x1xf32> to vector<32x1xf32>
    %148 = vector.broadcast %147 : vector<32x1xf32> to vector<32x8xf32>
    %149 = arith.select %146, %148, %128 : vector<32x8xi1>, vector<32x8xf32>
    %150 = vector.shape_cast %142 : vector<32x1xf32> to vector<32x1xf32>
    %151 = vector.broadcast %150 : vector<32x1xf32> to vector<32x8xf32>
    %152 = arith.select %146, %151, %131 : vector<32x8xi1>, vector<32x8xf32>
    %c7 = arith.constant 7 : index
    %c0_37 = arith.constant 0 : index
    %153 = vector.load %arg3[%c7, %c0_37] : memref<16x16xf32, #tpu.memory_space<vmem>>, vector<1x16xf32>
    %154 = vector.broadcast %153 : vector<1x16xf32> to vector<32x16xf32>
    %155 = arith.addf %1, %154 : vector<32x16xf32>
    %cst_38 = arith.constant dense<0xFF800000> : vector<32xf32>
    %156 = vector.multi_reduction <maximumf>, %155, %cst_38 [1] : vector<32x16xf32> to vector<32xf32>
    %157 = vector.shape_cast %156 : vector<32xf32> to vector<32x1xf32>
    %158 = vector.broadcast %157 : vector<32x1xf32> to vector<32x16xf32>
    %159 = arith.cmpf oeq, %155, %158 : vector<32x16xf32>
    %cst_39 = arith.constant 1.600000e+01 : f32
    %160 = vector.broadcast %cst_39 : f32 to vector<32x16xf32>
    %161 = arith.select %159, %3, %160 : vector<32x16xi1>, vector<32x16xf32>
    %cst_40 = arith.constant dense<0x7F800000> : vector<32xf32>
    %162 = vector.multi_reduction <minimumf>, %161, %cst_40 [1] : vector<32x16xf32> to vector<32xf32>
    %163 = vector.shape_cast %162 : vector<32xf32> to vector<32x1xf32>
    %cst_41 = arith.constant 0.000000e+00 : f32
    %164 = vector.broadcast %cst_41 : f32 to vector<32x1xf32>
    %165 = arith.maximumf %157, %164 : vector<32x1xf32>
    %c7_i32 = arith.constant 7 : i32
    %166 = vector.broadcast %c7_i32 : i32 to vector<32x8xi32>
    %167 = arith.cmpi eq, %4, %166 : vector<32x8xi32>
    %168 = vector.shape_cast %165 : vector<32x1xf32> to vector<32x1xf32>
    %169 = vector.broadcast %168 : vector<32x1xf32> to vector<32x8xf32>
    %170 = arith.select %167, %169, %149 : vector<32x8xi1>, vector<32x8xf32>
    %171 = vector.shape_cast %163 : vector<32x1xf32> to vector<32x1xf32>
    %172 = vector.broadcast %171 : vector<32x1xf32> to vector<32x8xf32>
    %173 = arith.select %167, %172, %152 : vector<32x8xi1>, vector<32x8xf32>
    %c0_42 = arith.constant 0 : index
    %c0_43 = arith.constant 0 : index
    %174 = vector.load %arg4[%c0_42, %c0_43] : memref<32x16xf32, #tpu.memory_space<vmem>>, vector<32x8xf32>
    tpu.vector_store %arg4[%c0_42, %c0_43], %170 {strides = array<i32>} : memref<32x16xf32, #tpu.memory_space<vmem>>, vector<32x8xf32>,
    %c0_44 = arith.constant 0 : index
    %c0_45 = arith.constant 0 : index
    %175 = vector.load %arg5[%c0_44, %c0_45] : memref<32x16xf32, #tpu.memory_space<vmem>>, vector<32x8xf32>
    tpu.vector_store %arg5[%c0_44, %c0_45], %173 {strides = array<i32>} : memref<32x16xf32, #tpu.memory_space<vmem>>, vector<32x8xf32>,
    %c8 = arith.constant 8 : index
    %c0_46 = arith.constant 0 : index
    %176 = vector.load %arg3[%c8, %c0_46] : memref<16x16xf32, #tpu.memory_space<vmem>>, vector<1x16xf32>
    %177 = vector.broadcast %176 : vector<1x16xf32> to vector<32x16xf32>
    %178 = arith.addf %1, %177 : vector<32x16xf32>
    %cst_47 = arith.constant dense<0xFF800000> : vector<32xf32>
    %179 = vector.multi_reduction <maximumf>, %178, %cst_47 [1] : vector<32x16xf32> to vector<32xf32>
    %180 = vector.shape_cast %179 : vector<32xf32> to vector<32x1xf32>
    %181 = vector.broadcast %180 : vector<32x1xf32> to vector<32x16xf32>
    %182 = arith.cmpf oeq, %178, %181 : vector<32x16xf32>
    %cst_48 = arith.constant 1.600000e+01 : f32
    %183 = vector.broadcast %cst_48 : f32 to vector<32x16xf32>
    %184 = arith.select %182, %3, %183 : vector<32x16xi1>, vector<32x16xf32>
    %cst_49 = arith.constant dense<0x7F800000> : vector<32xf32>
    %185 = vector.multi_reduction <minimumf>, %184, %cst_49 [1] : vector<32x16xf32> to vector<32xf32>
    %186 = vector.shape_cast %185 : vector<32xf32> to vector<32x1xf32>
    %cst_50 = arith.constant 0.000000e+00 : f32
    %187 = vector.broadcast %cst_50 : f32 to vector<32x1xf32>
    %188 = arith.maximumf %180, %187 : vector<32x1xf32>
    %c0_i32_51 = arith.constant 0 : i32
    %189 = vector.broadcast %c0_i32_51 : i32 to vector<32x8xi32>
    %190 = arith.cmpi eq, %4, %189 : vector<32x8xi32>
    %191 = vector.shape_cast %188 : vector<32x1xf32> to vector<32x1xf32>
    %192 = vector.broadcast %191 : vector<32x1xf32> to vector<32x8xf32>
    %193 = arith.select %190, %192, %5 : vector<32x8xi1>, vector<32x8xf32>
    %194 = vector.shape_cast %186 : vector<32x1xf32> to vector<32x1xf32>
    %195 = vector.broadcast %194 : vector<32x1xf32> to vector<32x8xf32>
    %196 = arith.select %190, %195, %5 : vector<32x8xi1>, vector<32x8xf32>
    %c9 = arith.constant 9 : index
    %c0_52 = arith.constant 0 : index
    %197 = vector.load %arg3[%c9, %c0_52] : memref<16x16xf32, #tpu.memory_space<vmem>>, vector<1x16xf32>
    %198 = vector.broadcast %197 : vector<1x16xf32> to vector<32x16xf32>
    %199 = arith.addf %1, %198 : vector<32x16xf32>
    %cst_53 = arith.constant dense<0xFF800000> : vector<32xf32>
    %200 = vector.multi_reduction <maximumf>, %199, %cst_53 [1] : vector<32x16xf32> to vector<32xf32>
    %201 = vector.shape_cast %200 : vector<32xf32> to vector<32x1xf32>
    %202 = vector.broadcast %201 : vector<32x1xf32> to vector<32x16xf32>
    %203 = arith.cmpf oeq, %199, %202 : vector<32x16xf32>
    %cst_54 = arith.constant 1.600000e+01 : f32
    %204 = vector.broadcast %cst_54 : f32 to vector<32x16xf32>
    %205 = arith.select %203, %3, %204 : vector<32x16xi1>, vector<32x16xf32>
    %cst_55 = arith.constant dense<0x7F800000> : vector<32xf32>
    %206 = vector.multi_reduction <minimumf>, %205, %cst_55 [1] : vector<32x16xf32> to vector<32xf32>
    %207 = vector.shape_cast %206 : vector<32xf32> to vector<32x1xf32>
    %cst_56 = arith.constant 0.000000e+00 : f32
    %208 = vector.broadcast %cst_56 : f32 to vector<32x1xf32>
    %209 = arith.maximumf %201, %208 : vector<32x1xf32>
    %c1_i32_57 = arith.constant 1 : i32
    %210 = vector.broadcast %c1_i32_57 : i32 to vector<32x8xi32>
    %211 = arith.cmpi eq, %4, %210 : vector<32x8xi32>
    %212 = vector.shape_cast %209 : vector<32x1xf32> to vector<32x1xf32>
    %213 = vector.broadcast %212 : vector<32x1xf32> to vector<32x8xf32>
    %214 = arith.select %211, %213, %193 : vector<32x8xi1>, vector<32x8xf32>
    %215 = vector.shape_cast %207 : vector<32x1xf32> to vector<32x1xf32>
    %216 = vector.broadcast %215 : vector<32x1xf32> to vector<32x8xf32>
    %217 = arith.select %211, %216, %196 : vector<32x8xi1>, vector<32x8xf32>
    %c10 = arith.constant 10 : index
    %c0_58 = arith.constant 0 : index
    %218 = vector.load %arg3[%c10, %c0_58] : memref<16x16xf32, #tpu.memory_space<vmem>>, vector<1x16xf32>
    %219 = vector.broadcast %218 : vector<1x16xf32> to vector<32x16xf32>
    %220 = arith.addf %1, %219 : vector<32x16xf32>
    %cst_59 = arith.constant dense<0xFF800000> : vector<32xf32>
    %221 = vector.multi_reduction <maximumf>, %220, %cst_59 [1] : vector<32x16xf32> to vector<32xf32>
    %222 = vector.shape_cast %221 : vector<32xf32> to vector<32x1xf32>
    %223 = vector.broadcast %222 : vector<32x1xf32> to vector<32x16xf32>
    %224 = arith.cmpf oeq, %220, %223 : vector<32x16xf32>
    %cst_60 = arith.constant 1.600000e+01 : f32
    %225 = vector.broadcast %cst_60 : f32 to vector<32x16xf32>
    %226 = arith.select %224, %3, %225 : vector<32x16xi1>, vector<32x16xf32>
    %cst_61 = arith.constant dense<0x7F800000> : vector<32xf32>
    %227 = vector.multi_reduction <minimumf>, %226, %cst_61 [1] : vector<32x16xf32> to vector<32xf32>
    %228 = vector.shape_cast %227 : vector<32xf32> to vector<32x1xf32>
    %cst_62 = arith.constant 0.000000e+00 : f32
    %229 = vector.broadcast %cst_62 : f32 to vector<32x1xf32>
    %230 = arith.maximumf %222, %229 : vector<32x1xf32>
    %c2_i32_63 = arith.constant 2 : i32
    %231 = vector.broadcast %c2_i32_63 : i32 to vector<32x8xi32>
    %232 = arith.cmpi eq, %4, %231 : vector<32x8xi32>
    %233 = vector.shape_cast %230 : vector<32x1xf32> to vector<32x1xf32>
    %234 = vector.broadcast %233 : vector<32x1xf32> to vector<32x8xf32>
    %235 = arith.select %232, %234, %214 : vector<32x8xi1>, vector<32x8xf32>
    %236 = vector.shape_cast %228 : vector<32x1xf32> to vector<32x1xf32>
    %237 = vector.broadcast %236 : vector<32x1xf32> to vector<32x8xf32>
    %238 = arith.select %232, %237, %217 : vector<32x8xi1>, vector<32x8xf32>
    %c11 = arith.constant 11 : index
    %c0_64 = arith.constant 0 : index
    %239 = vector.load %arg3[%c11, %c0_64] : memref<16x16xf32, #tpu.memory_space<vmem>>, vector<1x16xf32>
    %240 = vector.broadcast %239 : vector<1x16xf32> to vector<32x16xf32>
    %241 = arith.addf %1, %240 : vector<32x16xf32>
    %cst_65 = arith.constant dense<0xFF800000> : vector<32xf32>
    %242 = vector.multi_reduction <maximumf>, %241, %cst_65 [1] : vector<32x16xf32> to vector<32xf32>
    %243 = vector.shape_cast %242 : vector<32xf32> to vector<32x1xf32>
    %244 = vector.broadcast %243 : vector<32x1xf32> to vector<32x16xf32>
    %245 = arith.cmpf oeq, %241, %244 : vector<32x16xf32>
    %cst_66 = arith.constant 1.600000e+01 : f32
    %246 = vector.broadcast %cst_66 : f32 to vector<32x16xf32>
    %247 = arith.select %245, %3, %246 : vector<32x16xi1>, vector<32x16xf32>
    %cst_67 = arith.constant dense<0x7F800000> : vector<32xf32>
    %248 = vector.multi_reduction <minimumf>, %247, %cst_67 [1] : vector<32x16xf32> to vector<32xf32>
    %249 = vector.shape_cast %248 : vector<32xf32> to vector<32x1xf32>
    %cst_68 = arith.constant 0.000000e+00 : f32
    %250 = vector.broadcast %cst_68 : f32 to vector<32x1xf32>
    %251 = arith.maximumf %243, %250 : vector<32x1xf32>
    %c3_i32_69 = arith.constant 3 : i32
    %252 = vector.broadcast %c3_i32_69 : i32 to vector<32x8xi32>
    %253 = arith.cmpi eq, %4, %252 : vector<32x8xi32>
    %254 = vector.shape_cast %251 : vector<32x1xf32> to vector<32x1xf32>
    %255 = vector.broadcast %254 : vector<32x1xf32> to vector<32x8xf32>
    %256 = arith.select %253, %255, %235 : vector<32x8xi1>, vector<32x8xf32>
    %257 = vector.shape_cast %249 : vector<32x1xf32> to vector<32x1xf32>
    %258 = vector.broadcast %257 : vector<32x1xf32> to vector<32x8xf32>
    %259 = arith.select %253, %258, %238 : vector<32x8xi1>, vector<32x8xf32>
    %c12 = arith.constant 12 : index
    %c0_70 = arith.constant 0 : index
    %260 = vector.load %arg3[%c12, %c0_70] : memref<16x16xf32, #tpu.memory_space<vmem>>, vector<1x16xf32>
    %261 = vector.broadcast %260 : vector<1x16xf32> to vector<32x16xf32>
    %262 = arith.addf %1, %261 : vector<32x16xf32>
    %cst_71 = arith.constant dense<0xFF800000> : vector<32xf32>
    %263 = vector.multi_reduction <maximumf>, %262, %cst_71 [1] : vector<32x16xf32> to vector<32xf32>
    %264 = vector.shape_cast %263 : vector<32xf32> to vector<32x1xf32>
    %265 = vector.broadcast %264 : vector<32x1xf32> to vector<32x16xf32>
    %266 = arith.cmpf oeq, %262, %265 : vector<32x16xf32>
    %cst_72 = arith.constant 1.600000e+01 : f32
    %267 = vector.broadcast %cst_72 : f32 to vector<32x16xf32>
    %268 = arith.select %266, %3, %267 : vector<32x16xi1>, vector<32x16xf32>
    %cst_73 = arith.constant dense<0x7F800000> : vector<32xf32>
    %269 = vector.multi_reduction <minimumf>, %268, %cst_73 [1] : vector<32x16xf32> to vector<32xf32>
    %270 = vector.shape_cast %269 : vector<32xf32> to vector<32x1xf32>
    %cst_74 = arith.constant 0.000000e+00 : f32
    %271 = vector.broadcast %cst_74 : f32 to vector<32x1xf32>
    %272 = arith.maximumf %264, %271 : vector<32x1xf32>
    %c4_i32_75 = arith.constant 4 : i32
    %273 = vector.broadcast %c4_i32_75 : i32 to vector<32x8xi32>
    %274 = arith.cmpi eq, %4, %273 : vector<32x8xi32>
    %275 = vector.shape_cast %272 : vector<32x1xf32> to vector<32x1xf32>
    %276 = vector.broadcast %275 : vector<32x1xf32> to vector<32x8xf32>
    %277 = arith.select %274, %276, %256 : vector<32x8xi1>, vector<32x8xf32>
    %278 = vector.shape_cast %270 : vector<32x1xf32> to vector<32x1xf32>
    %279 = vector.broadcast %278 : vector<32x1xf32> to vector<32x8xf32>
    %280 = arith.select %274, %279, %259 : vector<32x8xi1>, vector<32x8xf32>
    %c13 = arith.constant 13 : index
    %c0_76 = arith.constant 0 : index
    %281 = vector.load %arg3[%c13, %c0_76] : memref<16x16xf32, #tpu.memory_space<vmem>>, vector<1x16xf32>
    %282 = vector.broadcast %281 : vector<1x16xf32> to vector<32x16xf32>
    %283 = arith.addf %1, %282 : vector<32x16xf32>
    %cst_77 = arith.constant dense<0xFF800000> : vector<32xf32>
    %284 = vector.multi_reduction <maximumf>, %283, %cst_77 [1] : vector<32x16xf32> to vector<32xf32>
    %285 = vector.shape_cast %284 : vector<32xf32> to vector<32x1xf32>
    %286 = vector.broadcast %285 : vector<32x1xf32> to vector<32x16xf32>
    %287 = arith.cmpf oeq, %283, %286 : vector<32x16xf32>
    %cst_78 = arith.constant 1.600000e+01 : f32
    %288 = vector.broadcast %cst_78 : f32 to vector<32x16xf32>
    %289 = arith.select %287, %3, %288 : vector<32x16xi1>, vector<32x16xf32>
    %cst_79 = arith.constant dense<0x7F800000> : vector<32xf32>
    %290 = vector.multi_reduction <minimumf>, %289, %cst_79 [1] : vector<32x16xf32> to vector<32xf32>
    %291 = vector.shape_cast %290 : vector<32xf32> to vector<32x1xf32>
    %cst_80 = arith.constant 0.000000e+00 : f32
    %292 = vector.broadcast %cst_80 : f32 to vector<32x1xf32>
    %293 = arith.maximumf %285, %292 : vector<32x1xf32>
    %c5_i32_81 = arith.constant 5 : i32
    %294 = vector.broadcast %c5_i32_81 : i32 to vector<32x8xi32>
    %295 = arith.cmpi eq, %4, %294 : vector<32x8xi32>
    %296 = vector.shape_cast %293 : vector<32x1xf32> to vector<32x1xf32>
    %297 = vector.broadcast %296 : vector<32x1xf32> to vector<32x8xf32>
    %298 = arith.select %295, %297, %277 : vector<32x8xi1>, vector<32x8xf32>
    %299 = vector.shape_cast %291 : vector<32x1xf32> to vector<32x1xf32>
    %300 = vector.broadcast %299 : vector<32x1xf32> to vector<32x8xf32>
    %301 = arith.select %295, %300, %280 : vector<32x8xi1>, vector<32x8xf32>
    %c14 = arith.constant 14 : index
    %c0_82 = arith.constant 0 : index
    %302 = vector.load %arg3[%c14, %c0_82] : memref<16x16xf32, #tpu.memory_space<vmem>>, vector<1x16xf32>
    %303 = vector.broadcast %302 : vector<1x16xf32> to vector<32x16xf32>
    %304 = arith.addf %1, %303 : vector<32x16xf32>
    %cst_83 = arith.constant dense<0xFF800000> : vector<32xf32>
    %305 = vector.multi_reduction <maximumf>, %304, %cst_83 [1] : vector<32x16xf32> to vector<32xf32>
    %306 = vector.shape_cast %305 : vector<32xf32> to vector<32x1xf32>
    %307 = vector.broadcast %306 : vector<32x1xf32> to vector<32x16xf32>
    %308 = arith.cmpf oeq, %304, %307 : vector<32x16xf32>
    %cst_84 = arith.constant 1.600000e+01 : f32
    %309 = vector.broadcast %cst_84 : f32 to vector<32x16xf32>
    %310 = arith.select %308, %3, %309 : vector<32x16xi1>, vector<32x16xf32>
    %cst_85 = arith.constant dense<0x7F800000> : vector<32xf32>
    %311 = vector.multi_reduction <minimumf>, %310, %cst_85 [1] : vector<32x16xf32> to vector<32xf32>
    %312 = vector.shape_cast %311 : vector<32xf32> to vector<32x1xf32>
    %cst_86 = arith.constant 0.000000e+00 : f32
    %313 = vector.broadcast %cst_86 : f32 to vector<32x1xf32>
    %314 = arith.maximumf %306, %313 : vector<32x1xf32>
    %c6_i32_87 = arith.constant 6 : i32
    %315 = vector.broadcast %c6_i32_87 : i32 to vector<32x8xi32>
    %316 = arith.cmpi eq, %4, %315 : vector<32x8xi32>
    %317 = vector.shape_cast %314 : vector<32x1xf32> to vector<32x1xf32>
    %318 = vector.broadcast %317 : vector<32x1xf32> to vector<32x8xf32>
    %319 = arith.select %316, %318, %298 : vector<32x8xi1>, vector<32x8xf32>
    %320 = vector.shape_cast %312 : vector<32x1xf32> to vector<32x1xf32>
    %321 = vector.broadcast %320 : vector<32x1xf32> to vector<32x8xf32>
    %322 = arith.select %316, %321, %301 : vector<32x8xi1>, vector<32x8xf32>
    %c15 = arith.constant 15 : index
    %c0_88 = arith.constant 0 : index
    %323 = vector.load %arg3[%c15, %c0_88] : memref<16x16xf32, #tpu.memory_space<vmem>>, vector<1x16xf32>
    %324 = vector.broadcast %323 : vector<1x16xf32> to vector<32x16xf32>
    %325 = arith.addf %1, %324 : vector<32x16xf32>
    %cst_89 = arith.constant dense<0xFF800000> : vector<32xf32>
    %326 = vector.multi_reduction <maximumf>, %325, %cst_89 [1] : vector<32x16xf32> to vector<32xf32>
    %327 = vector.shape_cast %326 : vector<32xf32> to vector<32x1xf32>
    %328 = vector.broadcast %327 : vector<32x1xf32> to vector<32x16xf32>
    %329 = arith.cmpf oeq, %325, %328 : vector<32x16xf32>
    %cst_90 = arith.constant 1.600000e+01 : f32
    %330 = vector.broadcast %cst_90 : f32 to vector<32x16xf32>
    %331 = arith.select %329, %3, %330 : vector<32x16xi1>, vector<32x16xf32>
    %cst_91 = arith.constant dense<0x7F800000> : vector<32xf32>
    %332 = vector.multi_reduction <minimumf>, %331, %cst_91 [1] : vector<32x16xf32> to vector<32xf32>
    %333 = vector.shape_cast %332 : vector<32xf32> to vector<32x1xf32>
    %cst_92 = arith.constant 0.000000e+00 : f32
    %334 = vector.broadcast %cst_92 : f32 to vector<32x1xf32>
    %335 = arith.maximumf %327, %334 : vector<32x1xf32>
    %c7_i32_93 = arith.constant 7 : i32
    %336 = vector.broadcast %c7_i32_93 : i32 to vector<32x8xi32>
    %337 = arith.cmpi eq, %4, %336 : vector<32x8xi32>
    %338 = vector.shape_cast %335 : vector<32x1xf32> to vector<32x1xf32>
    %339 = vector.broadcast %338 : vector<32x1xf32> to vector<32x8xf32>
    %340 = arith.select %337, %339, %319 : vector<32x8xi1>, vector<32x8xf32>
    %341 = vector.shape_cast %333 : vector<32x1xf32> to vector<32x1xf32>
    %342 = vector.broadcast %341 : vector<32x1xf32> to vector<32x8xf32>
    %343 = arith.select %337, %342, %322 : vector<32x8xi1>, vector<32x8xf32>
    %c0_94 = arith.constant 0 : index
    %c8_95 = arith.constant 8 : index
    %344 = vector.load %arg4[%c0_94, %c8_95] : memref<32x16xf32, #tpu.memory_space<vmem>>, vector<32x8xf32>
    tpu.vector_store %arg4[%c0_94, %c8_95], %340 {strides = array<i32>} : memref<32x16xf32, #tpu.memory_space<vmem>>, vector<32x8xf32>,
    %c0_96 = arith.constant 0 : index
    %c8_97 = arith.constant 8 : index
    %345 = vector.load %arg5[%c0_96, %c8_97] : memref<32x16xf32, #tpu.memory_space<vmem>>, vector<32x8xf32>
    tpu.vector_store %arg5[%c0_96, %c8_97], %343 {strides = array<i32>} : memref<32x16xf32, #tpu.memory_space<vmem>>, vector<32x8xf32>,
    return
  }
  func.func @transform_0(%arg0: i32, %arg1: i32) -> (i32, i32) {
    %c0_i32 = arith.constant 0 : i32
    %c0_i32_0 = arith.constant 0 : i32
    return %arg0, %c0_i32 : i32, i32
  }
  func.func @transform_1(%arg0: i32, %arg1: i32) -> (i32, i32) {
    %c0_i32 = arith.constant 0 : i32
    %c0_i32_0 = arith.constant 0 : i32
    %c0_i32_1 = arith.constant 0 : i32
    return %c0_i32, %c0_i32_0 : i32, i32
  }
  func.func @transform_2(%arg0: i32, %arg1: i32) -> (i32, i32) {
    %c0_i32 = arith.constant 0 : i32
    return %arg0, %arg1 : i32, i32
  }
  func.func @transform_3(%arg0: i32, %arg1: i32) -> (i32, i32) {
    %c0_i32 = arith.constant 0 : i32
    return %arg0, %arg1 : i32, i32
  }
}

</mosaic_0001>

<llo_original>
// kernel: tpu_custom_call.1
$region0: #{tpu_custom_call.1}
  #allocation0 [shape = 'u32[]', space=smem, size = 0x4, offset = 0x4, fixed_abs, tag = 'smem constant byte address 0x4 - core index']
  #allocation1 [shape = 'u32[144,128]{1,0:T(1,128)}', space=vmem, size = 0x12000, scoped, tag = 'internal scratch']
  #allocation2 [shape = 'f32[32,8]{1,0:T(8,128)}', space=vmem, size = 0x4000, scoped, tag = 'scratch operand']
  #allocation3 [shape = 'f32[32,8]{1,0:T(8,128)}', space=vmem, size = 0x4000, scoped, tag = 'scratch operand']
  %s0 = inlined_call_operand.vmem [shape: f32[64,16], index: 0, kind: input, shape index: {}]
  %s1 = inlined_call_operand.vmem [shape: f32[16,16], index: 1, kind: input, shape index: {}]
  %s2 = inlined_call_operand.vmem [shape: f32[64,16], index: 2, kind: output, shape index: {0}]
  %s3 = inlined_call_operand.vmem [shape: f32[64,16], index: 3, kind: output, shape index: {1}]
  %4 = xla_tuple %s2, %s3
  %s5 = sld [smem:[#allocation0]]
  $region49: #{tpu_custom_call.1} parent=0
    _
  %s7 = ssub.s32 1, %s5
  %s8 = scalar_select 0, %s7, %s5
  loop: start=0, step=1, limit=4
  $region2: #{tpu_custom_call.1} parent=0 // loop_pre_header
    _
  $region3: #{tpu_custom_call.1} parent=0 // loop_header
    %s10 = sphi 0, %s14
    %p11 = scmp.ge.s32.totalorder %s10, 4
    %s17 = sphi 0, %s29
    %s18 = sphi 0, %s25
    %s19 = sphi 0, %s17
    %s20 = sphi 0, %s18
    %s21 = sphi 0, %s19
    %s22 = sphi 0, %s20
    %s32 = sphi 0, %s34
    %s35 = sphi 0, %s32
    %s36 = sphi 0, %s35
    %s52 = sphi 0, %s36
    %s56 = sphi 0, %s56
    %s58 = sphi 0, %s56
    %s59 = sphi 0, %s58
    %s73 = sphi 0, %s59
    %s81 = sphi 0, %s83
    %s84 = sphi 0, %s81
    %s85 = sphi 0, %s84
    %s101 = sphi 0, %s85
    %s109 = sphi 0, %s111
    %s112 = sphi 0, %s109
    %s113 = sphi 0, %s112
    %s129 = sphi 0, %s113
  $region4: #{tpu_custom_call.1} parent=0 // loop_header_branch
    %13 = sbr.rel (%p11) target = $region8
  $region5: #{tpu_custom_call.1} parent=0 // loop_body
    %s15 = ssub.s32 %s10, 1
    %s16 = ssub.s32 %s10, 2
    %s23 = sadd.s32 1, %s18
    %p24 = scmp.ge.s32.totalorder %s23, 1
    %s25 = scalar_select %p24, 0, %s23
    %s26 = sadd.s32 1, %s17
    %s27 = scalar_select %p24, %s26, %s17
    %p28 = scmp.ge.s32.totalorder %s27, 2
    %s29 = scalar_select %p28, 0, %s27
    %s30 = ssub.s32 %s17, %s29
    %p31 = scmp.eq.s32.totalorder %s30, 0
    %s33 = sadd.s32 %s32, 1
    %s34 = scalar_select %p31, %s32, %s33
    %p37 = pneg %p31
    %p38 = scmp.eq.s32.totalorder %s10, 1
    %p39 = por %p37, %p38
    %p40 = scmp.ne.s32.totalorder %s32, %s35
    %p41 = scmp.eq.s32.totalorder %s10, 0
    %p42 = por %p40, %p41
    %p43 = scmp.ne.s32.totalorder %s32, %s35
    %p44 = scmp.eq.s32.totalorder %s15, 1
    %p45 = por %p43, %p44
    %p46 = scmp.ne.s32.totalorder %s35, %s36
    %p47 = scmp.eq.s32.totalorder %s15, 0
    %p48 = por %p46, %p47
    %p49 = scmp.ne.s32.totalorder %s35, %s36
    %p50 = scmp.eq.s32.totalorder %s16, 1
    %p51 = por %p49, %p50
    %p53 = scmp.ne.s32.totalorder %s36, %s52
    %p54 = scmp.eq.s32.totalorder %s16, 0
    %p55 = por %p53, %p54
    %s57 = sadd.s32 %s56, 1
    %p60 = scmp.eq.s32.totalorder %s10, 1
    %p61 = scmp.ne.s32.totalorder %s56, %s58
    %p62 = scmp.eq.s32.totalorder %s10, 0
    %p63 = por %p61, %p62
    %p64 = scmp.ne.s32.totalorder %s56, %s58
    %p65 = scmp.eq.s32.totalorder %s15, 1
    %p66 = por %p64, %p65
    %p67 = scmp.ne.s32.totalorder %s58, %s59
    %p68 = scmp.eq.s32.totalorder %s15, 0
    %p69 = por %p67, %p68
    %p70 = scmp.ne.s32.totalorder %s58, %s59
    %p71 = scmp.eq.s32.totalorder %s16, 1
    %p72 = por %p70, %p71
    %p74 = scmp.ne.s32.totalorder %s59, %s73
    %p75 = scmp.eq.s32.totalorder %s16, 0
    %p76 = por %p74, %p75
    %s77 = ssub.s32 %s17, %s29
    %s78 = ssub.s32 %s18, %s25
    %s79 = sor.u32 %s77, %s78
    %p80 = scmp.eq.s32.totalorder %s79, 0
    %s82 = sadd.s32 %s81, 1
    %s83 = scalar_select %p80, %s81, %s82
    %p86 = pneg %p80
    %p87 = scmp.eq.s32.totalorder %s10, 1
    %p88 = por %p86, %p87
    %p89 = scmp.ne.s32.totalorder %s81, %s84
    %p90 = scmp.eq.s32.totalorder %s10, 0
    %p91 = por %p89, %p90
    %p92 = scmp.ne.s32.totalorder %s81, %s84
    %p93 = scmp.eq.s32.totalorder %s15, 1
    %p94 = por %p92, %p93
    %p95 = scmp.ne.s32.totalorder %s84, %s85
    %p96 = scmp.eq.s32.totalorder %s15, 0
    %p97 = por %p95, %p96
    %p98 = scmp.ne.s32.totalorder %s84, %s85
    %p99 = scmp.eq.s32.totalorder %s16, 1
    %p100 = por %p98, %p99
    %p102 = scmp.ne.s32.totalorder %s85, %s101
    %p103 = scmp.eq.s32.totalorder %s16, 0
    %p104 = por %p102, %p103
    %s105 = ssub.s32 %s17, %s29
    %s106 = ssub.s32 %s18, %s25
    %s107 = sor.u32 %s105, %s106
    %p108 = scmp.eq.s32.totalorder %s107, 0
    %s110 = sadd.s32 %s109, 1
    %s111 = scalar_select %p108, %s109, %s110
    %p114 = pneg %p108
    %p115 = scmp.eq.s32.totalorder %s10, 1
    %p116 = por %p114, %p115
    %p117 = scmp.ne.s32.totalorder %s109, %s112
    %p118 = scmp.eq.s32.totalorder %s10, 0
    %p119 = por %p117, %p118
    %p120 = scmp.ne.s32.totalorder %s109, %s112
    %p121 = scmp.eq.s32.totalorder %s15, 1
    %p122 = por %p120, %p121
    %p123 = scmp.ne.s32.totalorder %s112, %s113
    %p124 = scmp.eq.s32.totalorder %s15, 0
    %p125 = por %p123, %p124
    %p126 = scmp.ne.s32.totalorder %s112, %s113
    %p127 = scmp.eq.s32.totalorder %s16, 1
    %p128 = por %p126, %p127
    %p130 = scmp.ne.s32.totalorder %s113, %s129
    %p131 = scmp.eq.s32.totalorder %s16, 0
    %p132 = por %p130, %p131
    %p133 = scmp.le.s32.totalorder 1, %s10
    %p134 = scmp.lt.s32.totalorder %s10, 3
    %p135 = pnand %p133, %p134
    %p136 = pneg %p135
    // Predicated region
    $region9: #{tpu_custom_call.1} parent=5 // pred_check
      _
    $region10: #{tpu_custom_call.1} parent=5 // pred_check_branch
      %138 = sbr.rel (%p135) target = $region12
    $region11: #{tpu_custom_call.1} parent=5 // pred_region
      %s139 = ssub.s32 %s10, 1
      // Predicated region
      $region13: #{tpu_custom_call.1} parent=11 // pred_check
        %p140 = pneg %p69
      $region14: #{tpu_custom_call.1} parent=11 // pred_check_branch
        %142 = sbr.rel (%p140) target = $region16
      $region15: #{tpu_custom_call.1} parent=11 // pred_region
        _
      $region16: #{tpu_custom_call.1} parent=11 // pred_fallthru
        _
    $region12: #{tpu_custom_call.1} parent=5 // pred_fallthru
      _
    %p143 = scmp.lt.s32.totalorder %s10, 2
    // Predicated region
    $region17: #{tpu_custom_call.1} parent=5 // pred_check
      %p144 = pneg %p143
    $region18: #{tpu_custom_call.1} parent=5 // pred_check_branch
      %146 = sbr.rel (%p144) target = $region20
    $region19: #{tpu_custom_call.1} parent=5 // pred_region
      // Predicated region
      $region21: #{tpu_custom_call.1} parent=19 // pred_check
        %p147 = pneg %p42
      $region22: #{tpu_custom_call.1} parent=19 // pred_check_branch
        %149 = sbr.rel (%p147) target = $region24
      $region23: #{tpu_custom_call.1} parent=19 // pred_region
        %s150 = smul.u32 4, %s17
        %p151 = scmp.lt.s32.totalorder %s150, 7
        %s152 = scalar_select %p151, %s150, 7
        %s153 = smul.addr %s152, 8
        %s154 = scalar_lea.vmem %s0, %s153
        %s155 = smul.u32 4, %s17
      $region24: #{tpu_custom_call.1} parent=19 // pred_fallthru
        _
    $region20: #{tpu_custom_call.1} parent=5 // pred_fallthru
      _
    %p156 = scmp.le.s32.totalorder 1, %s10
    %p157 = scmp.lt.s32.totalorder %s10, 3
    %p158 = pnand %p156, %p157
    %p159 = pneg %p158
    // Predicated region
    $region25: #{tpu_custom_call.1} parent=5 // pred_check
      _
    $region26: #{tpu_custom_call.1} parent=5 // pred_check_branch
      %161 = sbr.rel (%p158) target = $region28
    $region27: #{tpu_custom_call.1} parent=5 // pred_region
      %s162 = ssub.s32 %s10, 1
      %s163 = smul.u32 4, %s19
      %p164 = scmp.lt.s32.totalorder %s163, 7
      %s165 = scalar_select %p164, %s163, 7
      %s166 = smul.addr %s165, 8
      %s167 = scalar_lea.vmem %s0, %s166
      %p168 = pneg %p48
      %p169 = pneg %p45
      %p170 = pneg %p69
      %p171 = pneg %p66
      %p172 = pneg %p97
      %p173 = pneg %p94
      %s174 = smul.u32 4, %s19
      %p175 = scmp.lt.s32.totalorder %s174, 7
      %s176 = scalar_select %p175, %s174, 7
      %p177 = scmp.lt.s32.totalorder %s20, 0
      %s178 = scalar_select %p177, %s20, 0
      %s179 = sadd.s32 %s178, %s176
      %s180 = smul.addr %s179, 8
      %s181 = scalar_lea.vmem %s2, %s180
      %p182 = pneg %p125
      %p183 = pneg %p122
      %s184 = smul.u32 4, %s19
      %p185 = scmp.lt.s32.totalorder %s184, 7
      %s186 = scalar_select %p185, %s184, 7
      %p187 = scmp.lt.s32.totalorder %s20, 0
      %s188 = scalar_select %p187, %s20, 0
      %s189 = sadd.s32 %s188, %s186
      %s190 = smul.addr %s189, 8
      %s191 = scalar_lea.vmem %s3, %s190
      %s192 = smul.u32 4, %s19
      %p193 = scmp.lt.s32.totalorder %s192, 7
      %s194 = scalar_select %p193, %s192, 7
      %s195 = smul.addr %s194, 8
      %s196 = scalar_lea.vmem %s0, %s195
      %s197 = smul.u32 4, %s19
      %s198 = smul.u32 4, %s19
      %p199 = scmp.lt.s32.totalorder %s198, 7
      %s200 = scalar_select %p199, %s198, 7
      %p201 = scmp.lt.s32.totalorder %s20, 0
      %s202 = scalar_select %p201, %s20, 0
      %s203 = sadd.s32 %s202, %s200
      %s204 = smul.addr %s203, 8
      %s205 = scalar_lea.vmem %s2, %s204
      %s206 = smul.u32 4, %s19
      %s207 = smul.u32 4, %s19
      %p208 = scmp.lt.s32.totalorder %s207, 7
      %s209 = scalar_select %p208, %s207, 7
      %p210 = scmp.lt.s32.totalorder %s20, 0
      %s211 = scalar_select %p210, %s20, 0
      %s212 = sadd.s32 %s211, %s209
      %s213 = smul.addr %s212, 8
      %s214 = scalar_lea.vmem %s3, %s213
      %s215 = smul.u32 4, %s19
      %v216 = vld [vmem:[%s196] sm:$0xff]
      %v217 = vld [vmem:[%s196 + $0x8] sm:$0xff]
      %v218 = vld [vmem:[%s196 + $0x10] sm:$0xff]
      %v219 = vld [vmem:[%s196 + $0x18] sm:$0xff]
      %v220 = vand.u32 2147483647, %v216
      %v221 = vand.u32 2147483647, %v217
      %v222 = vand.u32 2147483647, %v218
      %v223 = vand.u32 2147483647, %v219
      %v224 = vlaneseq
      %v225 = vand.u32 %v224, 127
      %v226 = vcvt.s32.f32 %v225
      %v227 = vld [vmem:[%s1] sm:$0x1]
      %v228 = vlaneseq
      %v229 = vshrl.u32 %v228, 7
      %v230 = vsub.s32 0, %v229
      %v231 = vrot.slane %v227, %v230
      %v232 = vadd.f32 %v220, %v231
      %v233 = vadd.f32 %v221, %v231
      %v234 = vadd.f32 %v222, %v231
      %v235 = vadd.f32 %v223, %v231
      %vm236 = vcmask 130048
      %v237 = vsel %vm236, %v232, -inf
      %238 = vmax.xlane.f32.xlu0 %v237
      %v239 = vpop.xlane.xlu0 %238
      %v240 = vsel %vm236, %v233, -inf
      %241 = vmax.xlane.f32.xlu0 %v240
      %v242 = vpop.xlane.xlu0 %241
      %v243 = vsel %vm236, %v234, -inf
      %244 = vmax.xlane.f32.xlu0 %v243
      %v245 = vpop.xlane.xlu0 %244
      %v246 = vsel %vm236, %v235, -inf
      %247 = vmax.xlane.f32.xlu0 %v246
      %v248 = vpop.xlane.xlu0 %247
      %vm249 = vcmp.eq.f32.partialorder %v232, %v239
      %vm250 = vcmp.eq.f32.partialorder %v233, %v242
      %vm251 = vcmp.eq.f32.partialorder %v234, %v245
      %vm252 = vcmp.eq.f32.partialorder %v235, %v248
      %v253 = vsel %vm249, %v226, 16.0
      %v254 = vsel %vm250, %v226, 16.0
      %v255 = vsel %vm251, %v226, 16.0
      %v256 = vsel %vm252, %v226, 16.0
      %v257 = vsel %vm236, %v253, inf
      %258 = vmin.xlane.f32.xlu0 %v257
      %v259 = vpop.xlane.xlu0 %258
      %v260 = vsel %vm236, %v254, inf
      %261 = vmin.xlane.f32.xlu0 %v260
      %v262 = vpop.xlane.xlu0 %261
      %v263 = vsel %vm236, %v255, inf
      %264 = vmin.xlane.f32.xlu0 %v263
      %v265 = vpop.xlane.xlu0 %264
      %v266 = vsel %vm236, %v256, inf
      %267 = vmin.xlane.f32.xlu0 %v266
      %v268 = vpop.xlane.xlu0 %267
      %v269 = vmax.f32 %v239, 0.0
      %v270 = vmax.f32 %v242, 0.0
      %v271 = vmax.f32 %v245, 0.0
      %v272 = vmax.f32 %v248, 0.0
      %vm273 = vcmp.eq.s32.totalorder %v225, 0
      %v274 = vsel %vm273, %v269, 0.0
      %v275 = vsel %vm273, %v270, 0.0
      %v276 = vsel %vm273, %v271, 0.0
      %v277 = vsel %vm273, %v272, 0.0
      %v278 = vsel %vm273, %v259, 0.0
      %v279 = vsel %vm273, %v262, 0.0
      %v280 = vsel %vm273, %v265, 0.0
      %v281 = vsel %vm273, %v268, 0.0
      %v282 = vld [vmem:[%s1 + $0x1] sm:$0x1]
      %v283 = vlaneseq
      %v284 = vshrl.u32 %v283, 7
      %v285 = vsub.s32 0, %v284
      %v286 = vrot.slane %v282, %v285
      %v287 = vadd.f32 %v220, %v286
      %v288 = vadd.f32 %v221, %v286
      %v289 = vadd.f32 %v222, %v286
      %v290 = vadd.f32 %v223, %v286
      %v291 = vsel %vm236, %v287, -inf
      %292 = vmax.xlane.f32.xlu0 %v291
      %v293 = vpop.xlane.xlu0 %292
      %v294 = vsel %vm236, %v288, -inf
      %295 = vmax.xlane.f32.xlu0 %v294
      %v296 = vpop.xlane.xlu0 %295
      %v297 = vsel %vm236, %v289, -inf
      %298 = vmax.xlane.f32.xlu0 %v297
      %v299 = vpop.xlane.xlu0 %298
      %v300 = vsel %vm236, %v290, -inf
      %301 = vmax.xlane.f32.xlu0 %v300
      %v302 = vpop.xlane.xlu0 %301
      %vm303 = vcmp.eq.f32.partialorder %v287, %v293
      %vm304 = vcmp.eq.f32.partialorder %v288, %v296
      %vm305 = vcmp.eq.f32.partialorder %v289, %v299
      %vm306 = vcmp.eq.f32.partialorder %v290, %v302
      %v307 = vsel %vm303, %v226, 16.0
      %v308 = vsel %vm304, %v226, 16.0
      %v309 = vsel %vm305, %v226, 16.0
      %v310 = vsel %vm306, %v226, 16.0
      %v311 = vsel %vm236, %v307, inf
      %312 = vmin.xlane.f32.xlu0 %v311
      %v313 = vpop.xlane.xlu0 %312
      %v314 = vsel %vm236, %v308, inf
      %315 = vmin.xlane.f32.xlu0 %v314
      %v316 = vpop.xlane.xlu0 %315
      %v317 = vsel %vm236, %v309, inf
      %318 = vmin.xlane.f32.xlu0 %v317
      %v319 = vpop.xlane.xlu0 %318
      %v320 = vsel %vm236, %v310, inf
      %321 = vmin.xlane.f32.xlu0 %v320
      %v322 = vpop.xlane.xlu0 %321
      %v323 = vmax.f32 %v293, 0.0
      %v324 = vmax.f32 %v296, 0.0
      %v325 = vmax.f32 %v299, 0.0
      %v326 = vmax.f32 %v302, 0.0
      %vm327 = vcmp.eq.s32.totalorder %v225, 1
      %v328 = vsel %vm327, %v323, %v274
      %v329 = vsel %vm327, %v324, %v275
      %v330 = vsel %vm327, %v325, %v276
      %v331 = vsel %vm327, %v326, %v277
      %v332 = vsel %vm327, %v313, %v278
      %v333 = vsel %vm327, %v316, %v279
      %v334 = vsel %vm327, %v319, %v280
      %v335 = vsel %vm327, %v322, %v281
      %v336 = vld [vmem:[%s1 + $0x2] sm:$0x1]
      %v337 = vlaneseq
      %v338 = vshrl.u32 %v337, 7
      %v339 = vsub.s32 0, %v338
      %v340 = vrot.slane %v336, %v339
      %v341 = vadd.f32 %v220, %v340
      %v342 = vadd.f32 %v221, %v340
      %v343 = vadd.f32 %v222, %v340
      %v344 = vadd.f32 %v223, %v340
      %v345 = vsel %vm236, %v341, -inf
      %346 = vmax.xlane.f32.xlu0 %v345
      %v347 = vpop.xlane.xlu0 %346
      %v348 = vsel %vm236, %v342, -inf
      %349 = vmax.xlane.f32.xlu0 %v348
      %v350 = vpop.xlane.xlu0 %349
      %v351 = vsel %vm236, %v343, -inf
      %352 = vmax.xlane.f32.xlu0 %v351
      %v353 = vpop.xlane.xlu0 %352
      %v354 = vsel %vm236, %v344, -inf
      %355 = vmax.xlane.f32.xlu0 %v354
      %v356 = vpop.xlane.xlu0 %355
      %vm357 = vcmp.eq.f32.partialorder %v341, %v347
      %vm358 = vcmp.eq.f32.partialorder %v342, %v350
      %vm359 = vcmp.eq.f32.partialorder %v343, %v353
      %vm360 = vcmp.eq.f32.partialorder %v344, %v356
      %v361 = vsel %vm357, %v226, 16.0
      %v362 = vsel %vm358, %v226, 16.0
      %v363 = vsel %vm359, %v226, 16.0
      %v364 = vsel %vm360, %v226, 16.0
      %v365 = vsel %vm236, %v361, inf
      %366 = vmin.xlane.f32.xlu0 %v365
      %v367 = vpop.xlane.xlu0 %366
      %v368 = vsel %vm236, %v362, inf
      %369 = vmin.xlane.f32.xlu0 %v368
      %v370 = vpop.xlane.xlu0 %369
      %v371 = vsel %vm236, %v363, inf
      %372 = vmin.xlane.f32.xlu0 %v371
      %v373 = vpop.xlane.xlu0 %372
      %v374 = vsel %vm236, %v364, inf
      %375 = vmin.xlane.f32.xlu0 %v374
      %v376 = vpop.xlane.xlu0 %375
      %v377 = vmax.f32 %v347, 0.0
      %v378 = vmax.f32 %v350, 0.0
      %v379 = vmax.f32 %v353, 0.0
      %v380 = vmax.f32 %v356, 0.0
      %vm381 = vcmp.eq.s32.totalorder %v225, 2
      %v382 = vsel %vm381, %v377, %v328
      %v383 = vsel %vm381, %v378, %v329
      %v384 = vsel %vm381, %v379, %v330
      %v385 = vsel %vm381, %v380, %v331
      %v386 = vsel %vm381, %v367, %v332
      %v387 = vsel %vm381, %v370, %v333
      %v388 = vsel %vm381, %v373, %v334
      %v389 = vsel %vm381, %v376, %v335
      %v390 = vld [vmem:[%s1 + $0x3] sm:$0x1]
      %v391 = vlaneseq
      %v392 = vshrl.u32 %v391, 7
      %v393 = vsub.s32 0, %v392
      %v394 = vrot.slane %v390, %v393
      %v395 = vadd.f32 %v220, %v394
      %v396 = vadd.f32 %v221, %v394
      %v397 = vadd.f32 %v222, %v394
      %v398 = vadd.f32 %v223, %v394
      %v399 = vsel %vm236, %v395, -inf
      %400 = vmax.xlane.f32.xlu0 %v399
      %v401 = vpop.xlane.xlu0 %400
      %v402 = vsel %vm236, %v396, -inf
      %403 = vmax.xlane.f32.xlu0 %v402
      %v404 = vpop.xlane.xlu0 %403
      %v405 = vsel %vm236, %v397, -inf
      %406 = vmax.xlane.f32.xlu0 %v405
      %v407 = vpop.xlane.xlu0 %406
      %v408 = vsel %vm236, %v398, -inf
      %409 = vmax.xlane.f32.xlu0 %v408
      %v410 = vpop.xlane.xlu0 %409
      %vm411 = vcmp.eq.f32.partialorder %v395, %v401
      %vm412 = vcmp.eq.f32.partialorder %v396, %v404
      %vm413 = vcmp.eq.f32.partialorder %v397, %v407
      %vm414 = vcmp.eq.f32.partialorder %v398, %v410
      %v415 = vsel %vm411, %v226, 16.0
      %v416 = vsel %vm412, %v226, 16.0
      %v417 = vsel %vm413, %v226, 16.0
      %v418 = vsel %vm414, %v226, 16.0
      %v419 = vsel %vm236, %v415, inf
      %420 = vmin.xlane.f32.xlu0 %v419
      %v421 = vpop.xlane.xlu0 %420
      %v422 = vsel %vm236, %v416, inf
      %423 = vmin.xlane.f32.xlu0 %v422
      %v424 = vpop.xlane.xlu0 %423
      %v425 = vsel %vm236, %v417, inf
      %426 = vmin.xlane.f32.xlu0 %v425
      %v427 = vpop.xlane.xlu0 %426
      %v428 = vsel %vm236, %v418, inf
      %429 = vmin.xlane.f32.xlu0 %v428
      %v430 = vpop.xlane.xlu0 %429
      %v431 = vmax.f32 %v401, 0.0
      %v432 = vmax.f32 %v404, 0.0
      %v433 = vmax.f32 %v407, 0.0
      %v434 = vmax.f32 %v410, 0.0
      %vm435 = vcmp.eq.s32.totalorder %v225, 3
      %v436 = vsel %vm435, %v431, %v382
      %v437 = vsel %vm435, %v432, %v383
      %v438 = vsel %vm435, %v433, %v384
      %v439 = vsel %vm435, %v434, %v385
      %v440 = vsel %vm435, %v421, %v386
      %v441 = vsel %vm435, %v424, %v387
      %v442 = vsel %vm435, %v427, %v388
      %v443 = vsel %vm435, %v430, %v389
      %v444 = vld [vmem:[%s1 + $0x4] sm:$0x1]
      %v445 = vlaneseq
      %v446 = vshrl.u32 %v445, 7
      %v447 = vsub.s32 0, %v446
      %v448 = vrot.slane %v444, %v447
      %v449 = vadd.f32 %v220, %v448
      %v450 = vadd.f32 %v221, %v448
      %v451 = vadd.f32 %v222, %v448
      %v452 = vadd.f32 %v223, %v448
      %v453 = vsel %vm236, %v449, -inf
      %454 = vmax.xlane.f32.xlu0 %v453
      %v455 = vpop.xlane.xlu0 %454
      %v456 = vsel %vm236, %v450, -inf
      %457 = vmax.xlane.f32.xlu0 %v456
      %v458 = vpop.xlane.xlu0 %457
      %v459 = vsel %vm236, %v451, -inf
      %460 = vmax.xlane.f32.xlu0 %v459
      %v461 = vpop.xlane.xlu0 %460
      %v462 = vsel %vm236, %v452, -inf
      %463 = vmax.xlane.f32.xlu0 %v462
      %v464 = vpop.xlane.xlu0 %463
      %vm465 = vcmp.eq.f32.partialorder %v449, %v455
      %vm466 = vcmp.eq.f32.partialorder %v450, %v458
      %vm467 = vcmp.eq.f32.partialorder %v451, %v461
      %vm468 = vcmp.eq.f32.partialorder %v452, %v464
      %v469 = vsel %vm465, %v226, 16.0
      %v470 = vsel %vm466, %v226, 16.0
      %v471 = vsel %vm467, %v226, 16.0
      %v472 = vsel %vm468, %v226, 16.0
      %v473 = vsel %vm236, %v469, inf
      %474 = vmin.xlane.f32.xlu0 %v473
      %v475 = vpop.xlane.xlu0 %474
      %v476 = vsel %vm236, %v470, inf
      %477 = vmin.xlane.f32.xlu0 %v476
      %v478 = vpop.xlane.xlu0 %477
      %v479 = vsel %vm236, %v471, inf
      %480 = vmin.xlane.f32.xlu0 %v479
      %v481 = vpop.xlane.xlu0 %480
      %v482 = vsel %vm236, %v472, inf
      %483 = vmin.xlane.f32.xlu0 %v482
      %v484 = vpop.xlane.xlu0 %483
      %v485 = vmax.f32 %v455, 0.0
      %v486 = vmax.f32 %v458, 0.0
      %v487 = vmax.f32 %v461, 0.0
      %v488 = vmax.f32 %v464, 0.0
      %vm489 = vcmp.eq.s32.totalorder %v225, 4
      %v490 = vsel %vm489, %v485, %v436
      %v491 = vsel %vm489, %v486, %v437
      %v492 = vsel %vm489, %v487, %v438
      %v493 = vsel %vm489, %v488, %v439
      %v494 = vsel %vm489, %v475, %v440
      %v495 = vsel %vm489, %v478, %v441
      %v496 = vsel %vm489, %v481, %v442
      %v497 = vsel %vm489, %v484, %v443
      %v498 = vld [vmem:[%s1 + $0x5] sm:$0x1]
      %v499 = vlaneseq
      %v500 = vshrl.u32 %v499, 7
      %v501 = vsub.s32 0, %v500
      %v502 = vrot.slane %v498, %v501
      %v503 = vadd.f32 %v220, %v502
      %v504 = vadd.f32 %v221, %v502
      %v505 = vadd.f32 %v222, %v502
      %v506 = vadd.f32 %v223, %v502
      %v507 = vsel %vm236, %v503, -inf
      %508 = vmax.xlane.f32.xlu0 %v507
      %v509 = vpop.xlane.xlu0 %508
      %v510 = vsel %vm236, %v504, -inf
      %511 = vmax.xlane.f32.xlu0 %v510
      %v512 = vpop.xlane.xlu0 %511
      %v513 = vsel %vm236, %v505, -inf
      %514 = vmax.xlane.f32.xlu0 %v513
      %v515 = vpop.xlane.xlu0 %514
      %v516 = vsel %vm236, %v506, -inf
      %517 = vmax.xlane.f32.xlu0 %v516
      %v518 = vpop.xlane.xlu0 %517
      %vm519 = vcmp.eq.f32.partialorder %v503, %v509
      %vm520 = vcmp.eq.f32.partialorder %v504, %v512
      %vm521 = vcmp.eq.f32.partialorder %v505, %v515
      %vm522 = vcmp.eq.f32.partialorder %v506, %v518
      %v523 = vsel %vm519, %v226, 16.0
      %v524 = vsel %vm520, %v226, 16.0
      %v525 = vsel %vm521, %v226, 16.0
      %v526 = vsel %vm522, %v226, 16.0
      %v527 = vsel %vm236, %v523, inf
      %528 = vmin.xlane.f32.xlu0 %v527
      %v529 = vpop.xlane.xlu0 %528
      %v530 = vsel %vm236, %v524, inf
      %531 = vmin.xlane.f32.xlu0 %v530
      %v532 = vpop.xlane.xlu0 %531
      %v533 = vsel %vm236, %v525, inf
      %534 = vmin.xlane.f32.xlu0 %v533
      %v535 = vpop.xlane.xlu0 %534
      %v536 = vsel %vm236, %v526, inf
      %537 = vmin.xlane.f32.xlu0 %v536
      %v538 = vpop.xlane.xlu0 %537
      %v539 = vmax.f32 %v509, 0.0
      %v540 = vmax.f32 %v512, 0.0
      %v541 = vmax.f32 %v515, 0.0
      %v542 = vmax.f32 %v518, 0.0
      %vm543 = vcmp.eq.s32.totalorder %v225, 5
      %v544 = vsel %vm543, %v539, %v490
      %v545 = vsel %vm543, %v540, %v491
      %v546 = vsel %vm543, %v541, %v492
      %v547 = vsel %vm543, %v542, %v493
      %v548 = vsel %vm543, %v529, %v494
      %v549 = vsel %vm543, %v532, %v495
      %v550 = vsel %vm543, %v535, %v496
      %v551 = vsel %vm543, %v538, %v497
      %v552 = vld [vmem:[%s1 + $0x6] sm:$0x1]
      %v553 = vlaneseq
      %v554 = vshrl.u32 %v553, 7
      %v555 = vsub.s32 0, %v554
      %v556 = vrot.slane %v552, %v555
      %v557 = vadd.f32 %v220, %v556
      %v558 = vadd.f32 %v221, %v556
      %v559 = vadd.f32 %v222, %v556
      %v560 = vadd.f32 %v223, %v556
      %v561 = vsel %vm236, %v557, -inf
      %562 = vmax.xlane.f32.xlu0 %v561
      %v563 = vpop.xlane.xlu0 %562
      %v564 = vsel %vm236, %v558, -inf
      %565 = vmax.xlane.f32.xlu0 %v564
      %v566 = vpop.xlane.xlu0 %565
      %v567 = vsel %vm236, %v559, -inf
      %568 = vmax.xlane.f32.xlu0 %v567
      %v569 = vpop.xlane.xlu0 %568
      %v570 = vsel %vm236, %v560, -inf
      %571 = vmax.xlane.f32.xlu0 %v570
      %v572 = vpop.xlane.xlu0 %571
      %vm573 = vcmp.eq.f32.partialorder %v557, %v563
      %vm574 = vcmp.eq.f32.partialorder %v558, %v566
      %vm575 = vcmp.eq.f32.partialorder %v559, %v569
      %vm576 = vcmp.eq.f32.partialorder %v560, %v572
      %v577 = vsel %vm573, %v226, 16.0
      %v578 = vsel %vm574, %v226, 16.0
      %v579 = vsel %vm575, %v226, 16.0
      %v580 = vsel %vm576, %v226, 16.0
      %v581 = vsel %vm236, %v577, inf
      %582 = vmin.xlane.f32.xlu0 %v581
      %v583 = vpop.xlane.xlu0 %582
      %v584 = vsel %vm236, %v578, inf
      %585 = vmin.xlane.f32.xlu0 %v584
      %v586 = vpop.xlane.xlu0 %585
      %v587 = vsel %vm236, %v579, inf
      %588 = vmin.xlane.f32.xlu0 %v587
      %v589 = vpop.xlane.xlu0 %588
      %v590 = vsel %vm236, %v580, inf
      %591 = vmin.xlane.f32.xlu0 %v590
      %v592 = vpop.xlane.xlu0 %591
      %v593 = vmax.f32 %v563, 0.0
      %v594 = vmax.f32 %v566, 0.0
      %v595 = vmax.f32 %v569, 0.0
      %v596 = vmax.f32 %v572, 0.0
      %vm597 = vcmp.eq.s32.totalorder %v225, 6
      %v598 = vsel %vm597, %v593, %v544
      %v599 = vsel %vm597, %v594, %v545
      %v600 = vsel %vm597, %v595, %v546
      %v601 = vsel %vm597, %v596, %v547
      %v602 = vsel %vm597, %v583, %v548
      %v603 = vsel %vm597, %v586, %v549
      %v604 = vsel %vm597, %v589, %v550
      %v605 = vsel %vm597, %v592, %v551
      %v606 = vld [vmem:[%s1 + $0x7] sm:$0x1]
      %v607 = vlaneseq
      %v608 = vshrl.u32 %v607, 7
      %v609 = vsub.s32 0, %v608
      %v610 = vrot.slane %v606, %v609
      %v611 = vadd.f32 %v220, %v610
      %v612 = vadd.f32 %v221, %v610
      %v613 = vadd.f32 %v222, %v610
      %v614 = vadd.f32 %v223, %v610
      %v615 = vsel %vm236, %v611, -inf
      %616 = vmax.xlane.f32.xlu0 %v615
      %v617 = vpop.xlane.xlu0 %616
      %v618 = vsel %vm236, %v612, -inf
      %619 = vmax.xlane.f32.xlu0 %v618
      %v620 = vpop.xlane.xlu0 %619
      %v621 = vsel %vm236, %v613, -inf
      %622 = vmax.xlane.f32.xlu0 %v621
      %v623 = vpop.xlane.xlu0 %622
      %v624 = vsel %vm236, %v614, -inf
      %625 = vmax.xlane.f32.xlu0 %v624
      %v626 = vpop.xlane.xlu0 %625
      %vm627 = vcmp.eq.f32.partialorder %v611, %v617
      %vm628 = vcmp.eq.f32.partialorder %v612, %v620
      %vm629 = vcmp.eq.f32.partialorder %v613, %v623
      %vm630 = vcmp.eq.f32.partialorder %v614, %v626
      %v631 = vsel %vm627, %v226, 16.0
      %v632 = vsel %vm628, %v226, 16.0
      %v633 = vsel %vm629, %v226, 16.0
      %v634 = vsel %vm630, %v226, 16.0
      %v635 = vsel %vm236, %v631, inf
      %636 = vmin.xlane.f32.xlu0 %v635
      %v637 = vpop.xlane.xlu0 %636
      %v638 = vsel %vm236, %v632, inf
      %639 = vmin.xlane.f32.xlu0 %v638
      %v640 = vpop.xlane.xlu0 %639
      %v641 = vsel %vm236, %v633, inf
      %642 = vmin.xlane.f32.xlu0 %v641
      %v643 = vpop.xlane.xlu0 %642
      %v644 = vsel %vm236, %v634, inf
      %645 = vmin.xlane.f32.xlu0 %v644
      %v646 = vpop.xlane.xlu0 %645
      %v647 = vmax.f32 %v617, 0.0
      %v648 = vmax.f32 %v620, 0.0
      %v649 = vmax.f32 %v623, 0.0
      %v650 = vmax.f32 %v626, 0.0
      %vm651 = vcmp.eq.s32.totalorder %v225, 7
      %v652 = vsel %vm651, %v647, %v598
      %v653 = vsel %vm651, %v648, %v599
      %v654 = vsel %vm651, %v649, %v600
      %v655 = vsel %vm651, %v650, %v601
      %v656 = vsel %vm651, %v637, %v602
      %v657 = vsel %vm651, %v640, %v603
      %v658 = vsel %vm651, %v643, %v604
      %v659 = vsel %vm651, %v646, %v605
      %vm660 = vcmask 64512
      %661 = vst.msk [vmem:[%s205] sm:$0xff] %vm660, %v652
      %662 = vst.msk [vmem:[%s205 + $0x8] sm:$0xff] %vm660, %v653
      %663 = vst.msk [vmem:[%s205 + $0x10] sm:$0xff] %vm660, %v654
      %664 = vst.msk [vmem:[%s205 + $0x18] sm:$0xff] %vm660, %v655
      %665 = vst.msk [vmem:[%s214] sm:$0xff] %vm660, %v656
      %666 = vst.msk [vmem:[%s214 + $0x8] sm:$0xff] %vm660, %v657
      %667 = vst.msk [vmem:[%s214 + $0x10] sm:$0xff] %vm660, %v658
      %668 = vst.msk [vmem:[%s214 + $0x18] sm:$0xff] %vm660, %v659
      %v669 = vld [vmem:[%s1 + $0x8] sm:$0x1]
      %v670 = vlaneseq
      %v671 = vshrl.u32 %v670, 7
      %v672 = vsub.s32 0, %v671
      %v673 = vrot.slane %v669, %v672
      %v674 = vadd.f32 %v220, %v673
      %v675 = vadd.f32 %v221, %v673
      %v676 = vadd.f32 %v222, %v673
      %v677 = vadd.f32 %v223, %v673
      %v678 = vsel %vm236, %v674, -inf
      %679 = vmax.xlane.f32.xlu0 %v678
      %v680 = vpop.xlane.xlu0 %679
      %v681 = vsel %vm236, %v675, -inf
      %682 = vmax.xlane.f32.xlu0 %v681
      %v683 = vpop.xlane.xlu0 %682
      %v684 = vsel %vm236, %v676, -inf
      %685 = vmax.xlane.f32.xlu0 %v684
      %v686 = vpop.xlane.xlu0 %685
      %v687 = vsel %vm236, %v677, -inf
      %688 = vmax.xlane.f32.xlu0 %v687
      %v689 = vpop.xlane.xlu0 %688
      %vm690 = vcmp.eq.f32.partialorder %v674, %v680
      %vm691 = vcmp.eq.f32.partialorder %v675, %v683
      %vm692 = vcmp.eq.f32.partialorder %v676, %v686
      %vm693 = vcmp.eq.f32.partialorder %v677, %v689
      %v694 = vsel %vm690, %v226, 16.0
      %v695 = vsel %vm691, %v226, 16.0
      %v696 = vsel %vm692, %v226, 16.0
      %v697 = vsel %vm693, %v226, 16.0
      %v698 = vsel %vm236, %v694, inf
      %699 = vmin.xlane.f32.xlu0 %v698
      %v700 = vpop.xlane.xlu0 %699
      %v701 = vsel %vm236, %v695, inf
      %702 = vmin.xlane.f32.xlu0 %v701
      %v703 = vpop.xlane.xlu0 %702
      %v704 = vsel %vm236, %v696, inf
      %705 = vmin.xlane.f32.xlu0 %v704
      %v706 = vpop.xlane.xlu0 %705
      %v707 = vsel %vm236, %v697, inf
      %708 = vmin.xlane.f32.xlu0 %v707
      %v709 = vpop.xlane.xlu0 %708
      %v710 = vmax.f32 %v680, 0.0
      %v711 = vmax.f32 %v683, 0.0
      %v712 = vmax.f32 %v686, 0.0
      %v713 = vmax.f32 %v689, 0.0
      %v714 = vsel %vm273, %v710, 0.0
      %v715 = vsel %vm273, %v711, 0.0
      %v716 = vsel %vm273, %v712, 0.0
      %v717 = vsel %vm273, %v713, 0.0
      %v718 = vsel %vm273, %v700, 0.0
      %v719 = vsel %vm273, %v703, 0.0
      %v720 = vsel %vm273, %v706, 0.0
      %v721 = vsel %vm273, %v709, 0.0
      %v722 = vld [vmem:[%s1 + $0x9] sm:$0x1]
      %v723 = vlaneseq
      %v724 = vshrl.u32 %v723, 7
      %v725 = vsub.s32 0, %v724
      %v726 = vrot.slane %v722, %v725
      %v727 = vadd.f32 %v220, %v726
      %v728 = vadd.f32 %v221, %v726
      %v729 = vadd.f32 %v222, %v726
      %v730 = vadd.f32 %v223, %v726
      %v731 = vsel %vm236, %v727, -inf
      %732 = vmax.xlane.f32.xlu0 %v731
      %v733 = vpop.xlane.xlu0 %732
      %v734 = vsel %vm236, %v728, -inf
      %735 = vmax.xlane.f32.xlu0 %v734
      %v736 = vpop.xlane.xlu0 %735
      %v737 = vsel %vm236, %v729, -inf
      %738 = vmax.xlane.f32.xlu0 %v737
      %v739 = vpop.xlane.xlu0 %738
      %v740 = vsel %vm236, %v730, -inf
      %741 = vmax.xlane.f32.xlu0 %v740
      %v742 = vpop.xlane.xlu0 %741
      %vm743 = vcmp.eq.f32.partialorder %v727, %v733
      %vm744 = vcmp.eq.f32.partialorder %v728, %v736
      %vm745 = vcmp.eq.f32.partialorder %v729, %v739
      %vm746 = vcmp.eq.f32.partialorder %v730, %v742
      %v747 = vsel %vm743, %v226, 16.0
      %v748 = vsel %vm744, %v226, 16.0
      %v749 = vsel %vm745, %v226, 16.0
      %v750 = vsel %vm746, %v226, 16.0
      %v751 = vsel %vm236, %v747, inf
      %752 = vmin.xlane.f32.xlu0 %v751
      %v753 = vpop.xlane.xlu0 %752
      %v754 = vsel %vm236, %v748, inf
      %755 = vmin.xlane.f32.xlu0 %v754
      %v756 = vpop.xlane.xlu0 %755
      %v757 = vsel %vm236, %v749, inf
      %758 = vmin.xlane.f32.xlu0 %v757
      %v759 = vpop.xlane.xlu0 %758
      %v760 = vsel %vm236, %v750, inf
      %761 = vmin.xlane.f32.xlu0 %v760
      %v762 = vpop.xlane.xlu0 %761
      %v763 = vmax.f32 %v733, 0.0
      %v764 = vmax.f32 %v736, 0.0
      %v765 = vmax.f32 %v739, 0.0
      %v766 = vmax.f32 %v742, 0.0
      %v767 = vsel %vm327, %v763, %v714
      %v768 = vsel %vm327, %v764, %v715
      %v769 = vsel %vm327, %v765, %v716
      %v770 = vsel %vm327, %v766, %v717
      %v771 = vsel %vm327, %v753, %v718
      %v772 = vsel %vm327, %v756, %v719
      %v773 = vsel %vm327, %v759, %v720
      %v774 = vsel %vm327, %v762, %v721
      %v775 = vld [vmem:[%s1 + $0xa] sm:$0x1]
      %v776 = vlaneseq
      %v777 = vshrl.u32 %v776, 7
      %v778 = vsub.s32 0, %v777
      %v779 = vrot.slane %v775, %v778
      %v780 = vadd.f32 %v220, %v779
      %v781 = vadd.f32 %v221, %v779
      %v782 = vadd.f32 %v222, %v779
      %v783 = vadd.f32 %v223, %v779
      %v784 = vsel %vm236, %v780, -inf
      %785 = vmax.xlane.f32.xlu0 %v784
      %v786 = vpop.xlane.xlu0 %785
      %v787 = vsel %vm236, %v781, -inf
      %788 = vmax.xlane.f32.xlu0 %v787
      %v789 = vpop.xlane.xlu0 %788
      %v790 = vsel %vm236, %v782, -inf
      %791 = vmax.xlane.f32.xlu0 %v790
      %v792 = vpop.xlane.xlu0 %791
      %v793 = vsel %vm236, %v783, -inf
      %794 = vmax.xlane.f32.xlu0 %v793
      %v795 = vpop.xlane.xlu0 %794
      %vm796 = vcmp.eq.f32.partialorder %v780, %v786
      %vm797 = vcmp.eq.f32.partialorder %v781, %v789
      %vm798 = vcmp.eq.f32.partialorder %v782, %v792
      %vm799 = vcmp.eq.f32.partialorder %v783, %v795
      %v800 = vsel %vm796, %v226, 16.0
      %v801 = vsel %vm797, %v226, 16.0
      %v802 = vsel %vm798, %v226, 16.0
      %v803 = vsel %vm799, %v226, 16.0
      %v804 = vsel %vm236, %v800, inf
      %805 = vmin.xlane.f32.xlu0 %v804
      %v806 = vpop.xlane.xlu0 %805
      %v807 = vsel %vm236, %v801, inf
      %808 = vmin.xlane.f32.xlu0 %v807
      %v809 = vpop.xlane.xlu0 %808
      %v810 = vsel %vm236, %v802, inf
      %811 = vmin.xlane.f32.xlu0 %v810
      %v812 = vpop.xlane.xlu0 %811
      %v813 = vsel %vm236, %v803, inf
      %814 = vmin.xlane.f32.xlu0 %v813
      %v815 = vpop.xlane.xlu0 %814
      %v816 = vmax.f32 %v786, 0.0
      %v817 = vmax.f32 %v789, 0.0
      %v818 = vmax.f32 %v792, 0.0
      %v819 = vmax.f32 %v795, 0.0
      %v820 = vsel %vm381, %v816, %v767
      %v821 = vsel %vm381, %v817, %v768
      %v822 = vsel %vm381, %v818, %v769
      %v823 = vsel %vm381, %v819, %v770
      %v824 = vsel %vm381, %v806, %v771
      %v825 = vsel %vm381, %v809, %v772
      %v826 = vsel %vm381, %v812, %v773
      %v827 = vsel %vm381, %v815, %v774
      %v828 = vld [vmem:[%s1 + $0xb] sm:$0x1]
      %v829 = vlaneseq
      %v830 = vshrl.u32 %v829, 7
      %v831 = vsub.s32 0, %v830
      %v832 = vrot.slane %v828, %v831
      %v833 = vadd.f32 %v220, %v832
      %v834 = vadd.f32 %v221, %v832
      %v835 = vadd.f32 %v222, %v832
      %v836 = vadd.f32 %v223, %v832
      %v837 = vsel %vm236, %v833, -inf
      %838 = vmax.xlane.f32.xlu0 %v837
      %v839 = vpop.xlane.xlu0 %838
      %v840 = vsel %vm236, %v834, -inf
      %841 = vmax.xlane.f32.xlu0 %v840
      %v842 = vpop.xlane.xlu0 %841
      %v843 = vsel %vm236, %v835, -inf
      %844 = vmax.xlane.f32.xlu0 %v843
      %v845 = vpop.xlane.xlu0 %844
      %v846 = vsel %vm236, %v836, -inf
      %847 = vmax.xlane.f32.xlu0 %v846
      %v848 = vpop.xlane.xlu0 %847
      %vm849 = vcmp.eq.f32.partialorder %v833, %v839
      %vm850 = vcmp.eq.f32.partialorder %v834, %v842
      %vm851 = vcmp.eq.f32.partialorder %v835, %v845
      %vm852 = vcmp.eq.f32.partialorder %v836, %v848
      %v853 = vsel %vm849, %v226, 16.0
      %v854 = vsel %vm850, %v226, 16.0
      %v855 = vsel %vm851, %v226, 16.0
      %v856 = vsel %vm852, %v226, 16.0
      %v857 = vsel %vm236, %v853, inf
      %858 = vmin.xlane.f32.xlu0 %v857
      %v859 = vpop.xlane.xlu0 %858
      %v860 = vsel %vm236, %v854, inf
      %861 = vmin.xlane.f32.xlu0 %v860
      %v862 = vpop.xlane.xlu0 %861
      %v863 = vsel %vm236, %v855, inf
      %864 = vmin.xlane.f32.xlu0 %v863
      %v865 = vpop.xlane.xlu0 %864
      %v866 = vsel %vm236, %v856, inf
      %867 = vmin.xlane.f32.xlu0 %v866
      %v868 = vpop.xlane.xlu0 %867
      %v869 = vmax.f32 %v839, 0.0
      %v870 = vmax.f32 %v842, 0.0
      %v871 = vmax.f32 %v845, 0.0
      %v872 = vmax.f32 %v848, 0.0
      %v873 = vsel %vm435, %v869, %v820
      %v874 = vsel %vm435, %v870, %v821
      %v875 = vsel %vm435, %v871, %v822
      %v876 = vsel %vm435, %v872, %v823
      %v877 = vsel %vm435, %v859, %v824
      %v878 = vsel %vm435, %v862, %v825
      %v879 = vsel %vm435, %v865, %v826
      %v880 = vsel %vm435, %v868, %v827
      %v881 = vld [vmem:[%s1 + $0xc] sm:$0x1]
      %v882 = vlaneseq
      %v883 = vshrl.u32 %v882, 7
      %v884 = vsub.s32 0, %v883
      %v885 = vrot.slane %v881, %v884
      %v886 = vadd.f32 %v220, %v885
      %v887 = vadd.f32 %v221, %v885
      %v888 = vadd.f32 %v222, %v885
      %v889 = vadd.f32 %v223, %v885
      %v890 = vsel %vm236, %v886, -inf
      %891 = vmax.xlane.f32.xlu0 %v890
      %v892 = vpop.xlane.xlu0 %891
      %v893 = vsel %vm236, %v887, -inf
      %894 = vmax.xlane.f32.xlu0 %v893
      %v895 = vpop.xlane.xlu0 %894
      %v896 = vsel %vm236, %v888, -inf
      %897 = vmax.xlane.f32.xlu0 %v896
      %v898 = vpop.xlane.xlu0 %897
      %v899 = vsel %vm236, %v889, -inf
      %900 = vmax.xlane.f32.xlu0 %v899
      %v901 = vpop.xlane.xlu0 %900
      %vm902 = vcmp.eq.f32.partialorder %v886, %v892
      %vm903 = vcmp.eq.f32.partialorder %v887, %v895
      %vm904 = vcmp.eq.f32.partialorder %v888, %v898
      %vm905 = vcmp.eq.f32.partialorder %v889, %v901
      %v906 = vsel %vm902, %v226, 16.0
      %v907 = vsel %vm903, %v226, 16.0
      %v908 = vsel %vm904, %v226, 16.0
      %v909 = vsel %vm905, %v226, 16.0
      %v910 = vsel %vm236, %v906, inf
      %911 = vmin.xlane.f32.xlu0 %v910
      %v912 = vpop.xlane.xlu0 %911
      %v913 = vsel %vm236, %v907, inf
      %914 = vmin.xlane.f32.xlu0 %v913
      %v915 = vpop.xlane.xlu0 %914
      %v916 = vsel %vm236, %v908, inf
      %917 = vmin.xlane.f32.xlu0 %v916
      %v918 = vpop.xlane.xlu0 %917
      %v919 = vsel %vm236, %v909, inf
      %920 = vmin.xlane.f32.xlu0 %v919
      %v921 = vpop.xlane.xlu0 %920
      %v922 = vmax.f32 %v892, 0.0
      %v923 = vmax.f32 %v895, 0.0
      %v924 = vmax.f32 %v898, 0.0
      %v925 = vmax.f32 %v901, 0.0
      %v926 = vsel %vm489, %v922, %v873
      %v927 = vsel %vm489, %v923, %v874
      %v928 = vsel %vm489, %v924, %v875
      %v929 = vsel %vm489, %v925, %v876
      %v930 = vsel %vm489, %v912, %v877
      %v931 = vsel %vm489, %v915, %v878
      %v932 = vsel %vm489, %v918, %v879
      %v933 = vsel %vm489, %v921, %v880
      %v934 = vld [vmem:[%s1 + $0xd] sm:$0x1]
      %v935 = vlaneseq
      %v936 = vshrl.u32 %v935, 7
      %v937 = vsub.s32 0, %v936
      %v938 = vrot.slane %v934, %v937
      %v939 = vadd.f32 %v220, %v938
      %v940 = vadd.f32 %v221, %v938
      %v941 = vadd.f32 %v222, %v938
      %v942 = vadd.f32 %v223, %v938
      %v943 = vsel %vm236, %v939, -inf
      %944 = vmax.xlane.f32.xlu0 %v943
      %v945 = vpop.xlane.xlu0 %944
      %v946 = vsel %vm236, %v940, -inf
      %947 = vmax.xlane.f32.xlu0 %v946
      %v948 = vpop.xlane.xlu0 %947
      %v949 = vsel %vm236, %v941, -inf
      %950 = vmax.xlane.f32.xlu0 %v949
      %v951 = vpop.xlane.xlu0 %950
      %v952 = vsel %vm236, %v942, -inf
      %953 = vmax.xlane.f32.xlu0 %v952
      %v954 = vpop.xlane.xlu0 %953
      %vm955 = vcmp.eq.f32.partialorder %v939, %v945
      %vm956 = vcmp.eq.f32.partialorder %v940, %v948
      %vm957 = vcmp.eq.f32.partialorder %v941, %v951
      %vm958 = vcmp.eq.f32.partialorder %v942, %v954
      %v959 = vsel %vm955, %v226, 16.0
      %v960 = vsel %vm956, %v226, 16.0
      %v961 = vsel %vm957, %v226, 16.0
      %v962 = vsel %vm958, %v226, 16.0
      %v963 = vsel %vm236, %v959, inf
      %964 = vmin.xlane.f32.xlu0 %v963
      %v965 = vpop.xlane.xlu0 %964
      %v966 = vsel %vm236, %v960, inf
      %967 = vmin.xlane.f32.xlu0 %v966
      %v968 = vpop.xlane.xlu0 %967
      %v969 = vsel %vm236, %v961, inf
      %970 = vmin.xlane.f32.xlu0 %v969
      %v971 = vpop.xlane.xlu0 %970
      %v972 = vsel %vm236, %v962, inf
      %973 = vmin.xlane.f32.xlu0 %v972
      %v974 = vpop.xlane.xlu0 %973
      %v975 = vmax.f32 %v945, 0.0
      %v976 = vmax.f32 %v948, 0.0
      %v977 = vmax.f32 %v951, 0.0
      %v978 = vmax.f32 %v954, 0.0
      %v979 = vsel %vm543, %v975, %v926
      %v980 = vsel %vm543, %v976, %v927
      %v981 = vsel %vm543, %v977, %v928
      %v982 = vsel %vm543, %v978, %v929
      %v983 = vsel %vm543, %v965, %v930
      %v984 = vsel %vm543, %v968, %v931
      %v985 = vsel %vm543, %v971, %v932
      %v986 = vsel %vm543, %v974, %v933
      %v987 = vld [vmem:[%s1 + $0xe] sm:$0x1]
      %v988 = vlaneseq
      %v989 = vshrl.u32 %v988, 7
      %v990 = vsub.s32 0, %v989
      %v991 = vrot.slane %v987, %v990
      %v992 = vadd.f32 %v220, %v991
      %v993 = vadd.f32 %v221, %v991
      %v994 = vadd.f32 %v222, %v991
      %v995 = vadd.f32 %v223, %v991
      %v996 = vsel %vm236, %v992, -inf
      %997 = vmax.xlane.f32.xlu0 %v996
      %v998 = vpop.xlane.xlu0 %997
      %v999 = vsel %vm236, %v993, -inf
      %1000 = vmax.xlane.f32.xlu0 %v999
      %v1001 = vpop.xlane.xlu0 %1000
      %v1002 = vsel %vm236, %v994, -inf
      %1003 = vmax.xlane.f32.xlu0 %v1002
      %v1004 = vpop.xlane.xlu0 %1003
      %v1005 = vsel %vm236, %v995, -inf
      %1006 = vmax.xlane.f32.xlu0 %v1005
      %v1007 = vpop.xlane.xlu0 %1006
      %vm1008 = vcmp.eq.f32.partialorder %v992, %v998
      %vm1009 = vcmp.eq.f32.partialorder %v993, %v1001
      %vm1010 = vcmp.eq.f32.partialorder %v994, %v1004
      %vm1011 = vcmp.eq.f32.partialorder %v995, %v1007
      %v1012 = vsel %vm1008, %v226, 16.0
      %v1013 = vsel %vm1009, %v226, 16.0
      %v1014 = vsel %vm1010, %v226, 16.0
      %v1015 = vsel %vm1011, %v226, 16.0
      %v1016 = vsel %vm236, %v1012, inf
      %1017 = vmin.xlane.f32.xlu0 %v1016
      %v1018 = vpop.xlane.xlu0 %1017
      %v1019 = vsel %vm236, %v1013, inf
      %1020 = vmin.xlane.f32.xlu0 %v1019
      %v1021 = vpop.xlane.xlu0 %1020
      %v1022 = vsel %vm236, %v1014, inf
      %1023 = vmin.xlane.f32.xlu0 %v1022
      %v1024 = vpop.xlane.xlu0 %1023
      %v1025 = vsel %vm236, %v1015, inf
      %1026 = vmin.xlane.f32.xlu0 %v1025
      %v1027 = vpop.xlane.xlu0 %1026
      %v1028 = vmax.f32 %v998, 0.0
      %v1029 = vmax.f32 %v1001, 0.0
      %v1030 = vmax.f32 %v1004, 0.0
      %v1031 = vmax.f32 %v1007, 0.0
      %v1032 = vsel %vm597, %v1028, %v979
      %v1033 = vsel %vm597, %v1029, %v980
      %v1034 = vsel %vm597, %v1030, %v981
      %v1035 = vsel %vm597, %v1031, %v982
      %v1036 = vsel %vm597, %v1018, %v983
      %v1037 = vsel %vm597, %v1021, %v984
      %v1038 = vsel %vm597, %v1024, %v985
      %v1039 = vsel %vm597, %v1027, %v986
      %v1040 = vld [vmem:[%s1 + $0xf] sm:$0x1]
      %v1041 = vlaneseq
      %v1042 = vshrl.u32 %v1041, 7
      %v1043 = vsub.s32 0, %v1042
      %v1044 = vrot.slane %v1040, %v1043
      %v1045 = vadd.f32 %v220, %v1044
      %v1046 = vadd.f32 %v221, %v1044
      %v1047 = vadd.f32 %v222, %v1044
      %v1048 = vadd.f32 %v223, %v1044
      %v1049 = vsel %vm236, %v1045, -inf
      %1050 = vmax.xlane.f32.xlu0 %v1049
      %v1051 = vpop.xlane.xlu0 %1050
      %v1052 = vsel %vm236, %v1046, -inf
      %1053 = vmax.xlane.f32.xlu0 %v1052
      %v1054 = vpop.xlane.xlu0 %1053
      %v1055 = vsel %vm236, %v1047, -inf
      %1056 = vmax.xlane.f32.xlu0 %v1055
      %v1057 = vpop.xlane.xlu0 %1056
      %v1058 = vsel %vm236, %v1048, -inf
      %1059 = vmax.xlane.f32.xlu0 %v1058
      %v1060 = vpop.xlane.xlu0 %1059
      %vm1061 = vcmp.eq.f32.partialorder %v1045, %v1051
      %vm1062 = vcmp.eq.f32.partialorder %v1046, %v1054
      %vm1063 = vcmp.eq.f32.partialorder %v1047, %v1057
      %vm1064 = vcmp.eq.f32.partialorder %v1048, %v1060
      %v1065 = vsel %vm1061, %v226, 16.0
      %v1066 = vsel %vm1062, %v226, 16.0
      %v1067 = vsel %vm1063, %v226, 16.0
      %v1068 = vsel %vm1064, %v226, 16.0
      %v1069 = vsel %vm236, %v1065, inf
      %1070 = vmin.xlane.f32.xlu0 %v1069
      %v1071 = vpop.xlane.xlu0 %1070
      %v1072 = vsel %vm236, %v1066, inf
      %1073 = vmin.xlane.f32.xlu0 %v1072
      %v1074 = vpop.xlane.xlu0 %1073
      %v1075 = vsel %vm236, %v1067, inf
      %1076 = vmin.xlane.f32.xlu0 %v1075
      %v1077 = vpop.xlane.xlu0 %1076
      %v1078 = vsel %vm236, %v1068, inf
      %1079 = vmin.xlane.f32.xlu0 %v1078
      %v1080 = vpop.xlane.xlu0 %1079
      %v1081 = vmax.f32 %v1051, 0.0
      %v1082 = vmax.f32 %v1054, 0.0
      %v1083 = vmax.f32 %v1057, 0.0
      %v1084 = vmax.f32 %v1060, 0.0
      %v1085 = vsel %vm651, %v1081, %v1032
      %v1086 = vsel %vm651, %v1082, %v1033
      %v1087 = vsel %vm651, %v1083, %v1034
      %v1088 = vsel %vm651, %v1084, %v1035
      %v1089 = vsel %vm651, %v1071, %v1036
      %v1090 = vsel %vm651, %v1074, %v1037
      %v1091 = vsel %vm651, %v1077, %v1038
      %v1092 = vsel %vm651, %v1080, %v1039
      %1097 = vrot.lane.b32.xlu0 %v1085, 8
      %v1098 = vpop.permute.xlu0 %1097
      %1099 = vrot.lane.b32.xlu0 %v1086, 8
      %v1100 = vpop.permute.xlu0 %1099
      %1101 = vrot.lane.b32.xlu0 %v1087, 8
      %v1102 = vpop.permute.xlu0 %1101
      %1103 = vrot.lane.b32.xlu0 %v1088, 8
      %v1104 = vpop.permute.xlu0 %1103
      %vm1109 = vcmask 130112
      %1110 = vst.msk [vmem:[%s205] sm:$0xff] %vm1109, %v1098
      %1111 = vst.msk [vmem:[%s205 + $0x8] sm:$0xff] %vm1109, %v1100
      %1112 = vst.msk [vmem:[%s205 + $0x10] sm:$0xff] %vm1109, %v1102
      %1113 = vst.msk [vmem:[%s205 + $0x18] sm:$0xff] %vm1109, %v1104
      %1118 = vrot.lane.b32.xlu0 %v1089, 8
      %v1119 = vpop.permute.xlu0 %1118
      %1120 = vrot.lane.b32.xlu0 %v1090, 8
      %v1121 = vpop.permute.xlu0 %1120
      %1122 = vrot.lane.b32.xlu0 %v1091, 8
      %v1123 = vpop.permute.xlu0 %1122
      %1124 = vrot.lane.b32.xlu0 %v1092, 8
      %v1125 = vpop.permute.xlu0 %1124
      %1130 = vst.msk [vmem:[%s214] sm:$0xff] %vm1109, %v1119
      %1131 = vst.msk [vmem:[%s214 + $0x8] sm:$0xff] %vm1109, %v1121
      %1132 = vst.msk [vmem:[%s214 + $0x10] sm:$0xff] %vm1109, %v1123
      %1133 = vst.msk [vmem:[%s214 + $0x18] sm:$0xff] %vm1109, %v1125
      %s1134 = smul.u32 4, %s19
      %p1135 = scmp.lt.s32.totalorder %s1134, 7
      %s1136 = scalar_select %p1135, %s1134, 7
      %p1137 = scmp.lt.s32.totalorder %s20, 0
      %s1138 = scalar_select %p1137, %s20, 0
      %s1139 = sadd.s32 %s1138, %s1136
      %s1140 = smul.addr %s1139, 8
      %s1141 = scalar_lea.vmem %s2, %s1140
      %s1142 = smul.u32 4, %s19
      %p1143 = scmp.lt.s32.totalorder %s1142, 7
      %s1144 = scalar_select %p1143, %s1142, 7
      %p1145 = scmp.lt.s32.totalorder %s20, 0
      %s1146 = scalar_select %p1145, %s20, 0
      %s1147 = sadd.s32 %s1146, %s1144
      %s1148 = smul.addr %s1147, 8
      %s1149 = scalar_lea.vmem %s3, %s1148
      // Predicated region
      $region29: #{tpu_custom_call.1} parent=27 // pred_check
        %p1150 = pneg %p94
      $region30: #{tpu_custom_call.1} parent=27 // pred_check_branch
        %1152 = sbr.rel (%p1150) target = $region32
      $region31: #{tpu_custom_call.1} parent=27 // pred_region
        %s1153 = smul.u32 4, %s19
      $region32: #{tpu_custom_call.1} parent=27 // pred_fallthru
        _
      // Predicated region
      $region33: #{tpu_custom_call.1} parent=27 // pred_check
        %p1154 = pneg %p122
      $region34: #{tpu_custom_call.1} parent=27 // pred_check_branch
        %1156 = sbr.rel (%p1154) target = $region36
      $region35: #{tpu_custom_call.1} parent=27 // pred_region
        %s1157 = smul.u32 4, %s19
      $region36: #{tpu_custom_call.1} parent=27 // pred_fallthru
        _
    $region28: #{tpu_custom_call.1} parent=5 // pred_fallthru
      _
    %p1158 = scmp.le.s32.totalorder 2, %s10
    // Predicated region
    $region37: #{tpu_custom_call.1} parent=5 // pred_check
      %p1159 = pneg %p1158
    $region38: #{tpu_custom_call.1} parent=5 // pred_check_branch
      %1161 = sbr.rel (%p1159) target = $region40
    $region39: #{tpu_custom_call.1} parent=5 // pred_region
      %s1162 = ssub.s32 %s10, 2
      // Predicated region
      $region41: #{tpu_custom_call.1} parent=39 // pred_check
        %p1163 = pneg %p100
      $region42: #{tpu_custom_call.1} parent=39 // pred_check_branch
        %1165 = sbr.rel (%p1163) target = $region44
      $region43: #{tpu_custom_call.1} parent=39 // pred_region
        %s1166 = smul.u32 4, %s21
        %p1167 = scmp.lt.s32.totalorder %s1166, 7
        %s1168 = scalar_select %p1167, %s1166, 7
        %p1169 = scmp.lt.s32.totalorder %s22, 0
        %s1170 = scalar_select %p1169, %s22, 0
        %s1171 = sadd.s32 %s1170, %s1168
        %s1172 = smul.addr %s1171, 8
        %s1173 = scalar_lea.vmem %s2, %s1172
      $region44: #{tpu_custom_call.1} parent=39 // pred_fallthru
        _
      // Predicated region
      $region45: #{tpu_custom_call.1} parent=39 // pred_check
        %p1174 = pneg %p128
      $region46: #{tpu_custom_call.1} parent=39 // pred_check_branch
        %1176 = sbr.rel (%p1174) target = $region48
      $region47: #{tpu_custom_call.1} parent=39 // pred_region
        %s1177 = smul.u32 4, %s21
        %p1178 = scmp.lt.s32.totalorder %s1177, 7
        %s1179 = scalar_select %p1178, %s1177, 7
        %p1180 = scmp.lt.s32.totalorder %s22, 0
        %s1181 = scalar_select %p1180, %s22, 0
        %s1182 = sadd.s32 %s1181, %s1179
        %s1183 = smul.addr %s1182, 8
        %s1184 = scalar_lea.vmem %s3, %s1183
      $region48: #{tpu_custom_call.1} parent=39 // pred_fallthru
        _
    $region40: #{tpu_custom_call.1} parent=5 // pred_fallthru
      _
  $region6: #{tpu_custom_call.1} parent=0 // loop_footer
    %s14 = sadd.s32 1, %s10
  $region7: #{tpu_custom_call.1} parent=0 // loop_footer_branch
    %9 = sbr.rel target = $region3
  $region8: #{tpu_custom_call.1} parent=0 // loop_exit
    _

</llo_original>
